<compile_context>
chip_gen: v7x
topology: tpu7x:2x2x1
jax: 0.10.0
libtpu: 0.0.40
codegen_flags: <defaults>
</compile_context>

<pallas_src>
import math

import jax
import jax.numpy as jnp
import numpy as np
from jax.experimental import pallas as pl
from jax.experimental.pallas import tpu as pltpu

# Small test shapes (BERT-like layout: hidden dim last -> maps to the lane axis)
B, S, H, H2, C = 32, 8, 128, 64, 3
LANE = 128
EPS_LN = 1e-5
EPS_BN = 1e-5
_INV_SQRT2 = 0.7071067811865476

# Row layout of the packed per-feature vector array (shape [VEC_ROWS, LANE]).
ROW_WA2, ROW_BA1, ROW_LN_G, ROW_LN_B, ROW_B1, ROW_B2, ROW_B3 = range(7)
VEC_ROWS = 8


def _gelu_exact(x):
    # exact (erf-based) GELU, matching torch.nn.functional.gelu default
    return 0.5 * x * (1.0 + jax.lax.erf(x * _INV_SQRT2))


def classifier_head_kernel(seq_ref, pooled_ref, vecs_ref,
                           wa1_ref, w1_ref, w2_ref, w3_ref, out_ref):
    tb, s, h = seq_ref.shape
    h2 = wa1_ref.shape[1]

    seq = seq_ref[...]                                   # [TB, S, H]  f32
    seq2d = seq.reshape(tb * s, h)                       # [TB*S, H]   (layout-trivial)

    # packed small vectors (static slices, zero runtime cost)
    wa2 = vecs_ref[ROW_WA2:ROW_WA2 + 1, :h2]             # [1, H2]
    ba1 = vecs_ref[ROW_BA1:ROW_BA1 + 1, :h2]             # [1, H2]
    ln_g = vecs_ref[ROW_LN_G:ROW_LN_G + 1, :]            # [1, H]
    ln_b = vecs_ref[ROW_LN_B:ROW_LN_B + 1, :]            # [1, H]
    b1 = vecs_ref[ROW_B1:ROW_B1 + 1, :]                  # [1, H]   (BN1 folded)
    b2 = vecs_ref[ROW_B2:ROW_B2 + 1, :h2]                # [1, H2]  (BN2 folded)
    b3 = vecs_ref[ROW_B3:ROW_B3 + 1, :]                  # [1, 128] (padded)

    def mxu(a, w_ref):
        # bf16 operands, f32 accumulation (single-pass MXU); weights are bf16.
        return jnp.dot(a.astype(jnp.bfloat16), w_ref[...],
                       preferred_element_type=jnp.float32)

    # attention scorer: Linear(H, H//2) -> tanh -> Linear(H//2, 1)
    # (the second linear's scalar bias ba2 is omitted: softmax is shift-invariant)
    hid = jnp.tanh(mxu(seq2d, wa1_ref) + ba1)            # [TB*S, H2]
    hid3 = hid.reshape(tb, s, h2)                        # layout-trivial split
    scores = jnp.sum(hid3 * wa2.reshape(1, 1, h2), axis=-1)   # [TB, S]

    # softmax over the sequence axis
    scores = scores - jnp.max(scores, axis=1, keepdims=True)
    e = jnp.exp(scores)
    alpha = e / jnp.sum(e, axis=1, keepdims=True)        # [TB, S]

    # weighted sum over the sequence (bmm(alpha[:,None,:], seq).squeeze(1)).
    # At S=8 the lane->sublane relayout + sublane reduce here is negligible; for
    # large S prefer a dot_general contraction over S so it rides the MXU.
    attended = jnp.sum(alpha[:, :, None] * seq, axis=1)  # [TB, H]

    # LayerNorm(attended + pooled); dropout = identity in eval mode
    combined = attended + pooled_ref[...]
    mu = jnp.mean(combined, axis=-1, keepdims=True)
    var = jnp.mean((combined - mu) ** 2, axis=-1, keepdims=True)
    combined = (combined - mu) * jax.lax.rsqrt(var + EPS_LN)
    combined = combined * ln_g + ln_b
    residual = combined

    # fc1 (+ BN1 folded) -> gelu -> + residual
    x = _gelu_exact(mxu(combined, w1_ref) + b1) + residual
    # fc2 (+ BN2 folded) -> gelu
    x = _gelu_exact(mxu(x, w2_ref) + b2)
    # fc3 -> logits (output lanes padded to 128 for lane-dense stores)
    out = mxu(x, w3_ref) + b3
    out_ref[...] = out.astype(out_ref.dtype)


def _fold_bn(w, b, gamma, beta, mean, var, eps=EPS_BN):
    """Fold eval-mode BatchNorm1d into the preceding Linear (w: [in, out])."""
    scale = gamma * jax.lax.rsqrt(var + eps)
    return w * scale[None, :], (b - mean) * scale + beta


def prepare_inputs(p):
    """Host-side prep: BN folding, vector packing, lane padding, bf16 weights.

    Called ONCE (by make_classifier_head); results are closed over by the
    jitted per-call function so no prep ops run on the hot path.
    """
    w1f, b1f = _fold_bn(p["w1"], p["b1"], p["bn1_g"], p["bn1_b"], p["bn1_m"], p["bn1_v"])
    w2f, b2f = _fold_bn(p["w2"], p["b2"], p["bn2_g"], p["bn2_b"], p["bn2_m"], p["bn2_v"])
    w3p = jnp.zeros((H2, LANE), jnp.float32).at[:, :C].set(p["w3"])

    vecs = jnp.zeros((VEC_ROWS, LANE), jnp.float32)
    vecs = vecs.at[ROW_WA2, :H2].set(p["wa2"])
    vecs = vecs.at[ROW_BA1, :H2].set(p["ba1"])
    vecs = vecs.at[ROW_LN_G, :H].set(p["ln_g"])
    vecs = vecs.at[ROW_LN_B, :H].set(p["ln_b"])
    vecs = vecs.at[ROW_B1, :H].set(b1f)
    vecs = vecs.at[ROW_B2, :H2].set(b2f)
    vecs = vecs.at[ROW_B3, :C].set(p["b3"])

    return dict(
        vecs=vecs,
        wa1=p["wa1"].astype(jnp.bfloat16),
        w1=w1f.astype(jnp.bfloat16),
        w2=w2f.astype(jnp.bfloat16),
        w3=w3p.astype(jnp.bfloat16),
    )


def _num_tensorcores():
    """v7x has 2 TensorCores per chip; v5e/v6e have 1.  Fallback: 1."""
    try:
        kind = jax.devices()[0].device_kind.lower()
    except Exception:
        return 1
    return 2 if ("v7" in kind or "7x" in kind) else 1


def make_classifier_head(params):
    """Prep parameters once; return a jitted (seq, pooled) -> logits callable."""
    prep = prepare_inputs(params)
    n_tc = _num_tensorcores()

    @jax.jit
    def head(seq, pooled):
        Bn, Sn, Hn = seq.shape

        # Pad batch to a sublane-aligned multiple of (8 * n_tc) so every grid
        # step's blocks are (8,128)-friendly and stores are unmasked.
        align = 8 * n_tc
        Bp = ((Bn + align - 1) // align) * align
        if Bp != Bn:
            seq_p = jnp.zeros((Bp, Sn, Hn), seq.dtype).at[:Bn].set(seq)
            pooled_p = jnp.zeros((Bp, Hn), pooled.dtype).at[:Bn].set(pooled)
        else:
            seq_p, pooled_p = seq, pooled

        # v5e/v6e: single grid step (no serial-loop overhead; 256 rows into the
        # MXU).  v7x: exactly 2 parallel steps so the batch shards across TCs.
        grid_n = n_tc if n_tc > 1 else 1
        tb = Bp // grid_n

        def full_spec(shape):
            return pl.BlockSpec(shape, lambda i, _s=shape: (0,) * len(_s))

        # Advisory cost estimate so XLA schedules/overlaps this tiny call well.
        flops = int(
            2 * Bp * Sn * Hn * H2        # attention linear
            + 2 * Bp * Sn * H2           # scorer dot
            + 2 * Bp * Sn * Hn           # weighted sum
            + 10 * Bp * Hn               # layernorm-ish elementwise
            + 2 * Bp * (Hn * Hn + Hn * H2 + H2 * LANE))   # fc1/fc2/fc3
        transcendentals = int(Bp * Sn * H2 + Bp * Sn + Bp * (Hn + H2))
        bytes_accessed = int(
            4 * (Bp * Sn * Hn + Bp * Hn + VEC_ROWS * LANE + Bp * LANE)
            + 2 * (Hn * H2 + Hn * Hn + Hn * H2 + H2 * LANE))

        out = pl.pallas_call(
            classifier_head_kernel,
            out_shape=jax.ShapeDtypeStruct((Bp, LANE), jnp.float32),
            grid=(grid_n,),
            in_specs=[
                pl.BlockSpec((tb, Sn, Hn), lambda i: (i, 0, 0)),     # seq
                pl.BlockSpec((tb, Hn), lambda i: (i, 0)),            # pooled
                full_spec(prep["vecs"].shape),                       # packed vectors
                full_spec(prep["wa1"].shape),                        # attention W1
                full_spec(prep["w1"].shape),                         # fc1 (BN folded)
                full_spec(prep["w2"].shape),                         # fc2 (BN folded)
                full_spec(prep["w3"].shape),                         # fc3 (lane padded)
            ],
            out_specs=pl.BlockSpec((tb, LANE), lambda i: (i, 0)),
            compiler_params=pltpu.CompilerParams(
                dimension_semantics=("parallel",)),                  # v7x: 2 TCs
            cost_estimate=pl.CostEstimate(
                flops=flops, transcendentals=transcendentals,
                bytes_accessed=bytes_accessed),
        )(seq_p, pooled_p, prep["vecs"],
          prep["wa1"], prep["w1"], prep["w2"], prep["w3"])
        return out[:Bn, :C]

    return head


def classifier_head(seq, pooled, params):
    """Convenience one-shot wrapper (preps params each call; prefer
    make_classifier_head for repeated use)."""
    return make_classifier_head(params)(seq, pooled)


# ----------------------------------------------------------------------------
# References


def reference_head_matched(seq, pooled, prep):
    """Pure-JAX reference using the SAME prepared (folded, bf16) arrays as the
    kernel -> tight tolerance check of the kernel implementation."""
    v = prep["vecs"]
    h2 = prep["wa1"].shape[1]
    Bn, Sn, Hn = seq.shape

    def mm(a, w):
        return jnp.dot(a.astype(jnp.bfloat16), w, preferred_element_type=jnp.float32)

    seq2d = seq.reshape(Bn * Sn, Hn)
    hid = jnp.tanh(mm(seq2d, prep["wa1"]) + v[ROW_BA1:ROW_BA1 + 1, :h2])
    hid3 = hid.reshape(Bn, Sn, h2)
    scores = jnp.sum(hid3 * v[ROW_WA2, :h2][None, None, :], axis=-1)
    scores = scores - jnp.max(scores, axis=1, keepdims=True)
    e = jnp.exp(scores)
    alpha = e / jnp.sum(e, axis=1, keepdims=True)
    attended = jnp.sum(alpha[:, :, None] * seq, axis=1)
    combined = attended + pooled
    mu = jnp.mean(combined, axis=-1, keepdims=True)
    var = jnp.mean((combined - mu) ** 2, axis=-1, keepdims=True)
    combined = (combined - mu) * jax.lax.rsqrt(var + EPS_LN)
    combined = combined * v[ROW_LN_G:ROW_LN_G + 1, :] + v[ROW_LN_B:ROW_LN_B + 1, :]
    residual = combined
    x = _gelu_exact(mm(combined, prep["w1"]) + v[ROW_B1:ROW_B1 + 1, :]) + residual
    x = _gelu_exact(mm(x, prep["w2"]) + v[ROW_B2:ROW_B2 + 1, :h2])
    out = mm(x, prep["w3"]) + v[ROW_B3:ROW_B3 + 1, :]
    return out[:, :C]


def reference_head_full(seq, pooled, p):
    """Original-module semantics: f32/HIGHEST matmuls, explicit eval-mode BN,
    ba2 included (it is a softmax no-op but kept for fidelity)."""
    prec = jax.lax.Precision.HIGHEST
    Bn, Sn, Hn = seq.shape
    seq2d = seq.reshape(Bn * Sn, Hn)
    hid = jnp.tanh(jnp.dot(seq2d, p["wa1"], precision=prec) + p["ba1"][None, :])
    scores = (jnp.dot(hid, p["wa2"][:, None], precision=prec)[:, 0]
              + p["ba2"]).reshape(Bn, Sn)
    alpha = jax.nn.softmax(scores, axis=1)
    attended = jnp.einsum("bs,bsh->bh", alpha, seq, precision=prec)
    combined = attended + pooled
    mu = jnp.mean(combined, axis=-1, keepdims=True)
    var = jnp.mean((combined - mu) ** 2, axis=-1, keepdims=True)
    combined = ((combined - mu) * jax.lax.rsqrt(var + EPS_LN)
                * p["ln_g"][None, :] + p["ln_b"][None, :])
    residual = combined
    x = jnp.dot(combined, p["w1"], precision=prec) + p["b1"][None, :]
    x = ((x - p["bn1_m"][None, :]) * jax.lax.rsqrt(p["bn1_v"][None, :] + EPS_BN)
         * p["bn1_g"][None, :] + p["bn1_b"][None, :])
    x = _gelu_exact(x) + residual
    x = jnp.dot(x, p["w2"], precision=prec) + p["b2"][None, :]
    x = ((x - p["bn2_m"][None, :]) * jax.lax.rsqrt(p["bn2_v"][None, :] + EPS_BN)
         * p["bn2_g"][None, :] + p["bn2_b"][None, :])
    x = _gelu_exact(x)
    return jnp.dot(x, p["w3"], precision=prec) + p["b3"][None, :]


# ----------------------------------------------------------------------------
# Parameters


def make_params(key):
    ks = jax.random.split(key, 19)

    def xavier(k, shape):
        fan_in, fan_out = shape
        std = math.sqrt(2.0 / (fan_in + fan_out))
        return std * jax.random.normal(k, shape, jnp.float32)

    def small(k, shape, scale=0.05):
        return scale * jax.random.normal(k, shape, jnp.float32)

    return {
        # attention scorer (weights stored [in, out]) and its biases
        "wa1": xavier(ks[0], (H, H2)),
        "ba1": small(ks[1], (H2,)),
        "wa2": xavier(ks[2], (H2, 1)).reshape(H2),
        "ba2": jnp.float32(0.01),
        # LayerNorm
        "ln_g": 1.0 + small(ks[3], (H,)),
        "ln_b": small(ks[4], (H,)),
        # fc1 / bn1 (non-trivial running stats to exercise the folding)
        "w1": xavier(ks[5], (H, H)),
        "b1": small(ks[6], (H,)),
        "bn1_g": 1.0 + small(ks[7], (H,)),
        "bn1_b": small(ks[8], (H,)),
        "bn1_m": small(ks[9], (H,), 0.1),
        "bn1_v": jax.random.uniform(ks[10], (H,), jnp.float32, 0.5, 1.5),
        # fc2 / bn2
        "w2": xavier(ks[11], (H, H2)),
        "b2": small(ks[12], (H2,)),
        "bn2_g": 1.0 + small(ks[13], (H2,)),
        "bn2_b": small(ks[14], (H2,)),
        "bn2_m": small(ks[15], (H2,), 0.1),
        "bn2_v": jax.random.uniform(ks[16], (H2,), jnp.float32, 0.5, 1.5),
        # fc3
        "w3": xavier(ks[17], (H2, C)),
        "b3": small(ks[18], (C,)),
    }


if __name__ == "__main__":
    key = jax.random.PRNGKey(0)
    k_seq, k_pool, k_par = jax.random.split(key, 3)

    # synthetic stand-ins for BERT's last_hidden_state / pooler_output
    seq = jax.random.normal(k_seq, (B, S, H), dtype=jnp.float32)
    pooled = jax.random.normal(k_pool, (B, H), dtype=jnp.float32)
    params = make_params(k_par)

    # Prep once (hoisted), then the jitted head is the hot path.
    head = make_classifier_head(params)
    logits = jax.block_until_ready(head(seq, pooled))
    assert logits.shape == (B, C)
    # second call reuses the compiled executable and the prepped constants
    logits = jax.block_until_ready(head(seq, pooled))

    # (1) Tight check: kernel exactly implements the optimized computation
    #     (BN-folded weights, bf16 matmul operands, f32 everything else).
    prep = prepare_inputs(params)
    ref_m = jax.block_until_ready(reference_head_matched(seq, pooled, prep))
    np.testing.assert_allclose(np.asarray(logits), np.asarray(ref_m),
                               rtol=1e-4, atol=1e-4)

    # (2) Loose check vs. the original f32 module semantics: documents the
    #     bf16-matmul precision trade-off (observed deviation ~1e-2).
    ref_f = jax.block_until_ready(reference_head_full(seq, pooled, params))
    np.testing.assert_allclose(np.asarray(logits), np.asarray(ref_f),
                               rtol=5e-2, atol=5e-2)

    print("KERNEL_OK")
</pallas_src>

<mosaic_0001>
module attributes {stable_mosaic.version = 11 : i64} {
  func.func @classifier_head_kernel(%arg0: i32, %arg1: memref<32x8x128xf32, #tpu.memory_space<vmem>>, %arg2: memref<32x128xf32, #tpu.memory_space<vmem>>, %arg3: memref<8x128xf32, #tpu.memory_space<vmem>>, %arg4: memref<128x64xbf16, #tpu.memory_space<vmem>>, %arg5: memref<128x128xbf16, #tpu.memory_space<vmem>>, %arg6: memref<128x64xbf16, #tpu.memory_space<vmem>>, %arg7: memref<64x128xbf16, #tpu.memory_space<vmem>>, %arg8: memref<32x128xf32, #tpu.memory_space<vmem>>) attributes {dimension_semantics = [#tpu.dimension_semantics<parallel>], iteration_bounds = array<i64: 1>, scalar_prefetch = 0 : i64, scratch_operands = 0 : i64, tpu.core_type = #tpu.core_type<tc>, window_params = [{transform_indices = @transform_0, window_bounds = array<i64: 32, 8, 128>}, {transform_indices = @transform_1, window_bounds = array<i64: 32, 128>}, {pipeline_mode = #tpu.pipeline_mode<synchronous>, transform_indices = @transform_2, window_bounds = array<i64: 8, 128>}, {pipeline_mode = #tpu.pipeline_mode<synchronous>, transform_indices = @transform_3, window_bounds = array<i64: 128, 64>}, {pipeline_mode = #tpu.pipeline_mode<synchronous>, transform_indices = @transform_4, window_bounds = array<i64: 128, 128>}, {pipeline_mode = #tpu.pipeline_mode<synchronous>, transform_indices = @transform_5, window_bounds = array<i64: 128, 64>}, {pipeline_mode = #tpu.pipeline_mode<synchronous>, transform_indices = @transform_6, window_bounds = array<i64: 64, 128>}, {transform_indices = @transform_7, window_bounds = array<i64: 32, 128>}]} {
    %c0 = arith.constant 0 : index
    %c0_0 = arith.constant 0 : index
    %c0_1 = arith.constant 0 : index
    %0 = vector.load %arg1[%c0, %c0_0, %c0_1] : memref<32x8x128xf32, #tpu.memory_space<vmem>>, vector<32x8x128xf32>
    %1 = vector.shape_cast %0 : vector<32x8x128xf32> to vector<256x128xf32>
    %c0_2 = arith.constant 0 : index
    %c0_3 = arith.constant 0 : index
    %2 = vector.load %arg3[%c0_2, %c0_3] : memref<8x128xf32, #tpu.memory_space<vmem>>, vector<1x64xf32>
    %c1 = arith.constant 1 : index
    %c0_4 = arith.constant 0 : index
    %3 = vector.load %arg3[%c1, %c0_4] : memref<8x128xf32, #tpu.memory_space<vmem>>, vector<1x64xf32>
    %c2 = arith.constant 2 : index
    %c0_5 = arith.constant 0 : index
    %4 = vector.load %arg3[%c2, %c0_5] : memref<8x128xf32, #tpu.memory_space<vmem>>, vector<1x128xf32>
    %c3 = arith.constant 3 : index
    %c0_6 = arith.constant 0 : index
    %5 = vector.load %arg3[%c3, %c0_6] : memref<8x128xf32, #tpu.memory_space<vmem>>, vector<1x128xf32>
    %c4 = arith.constant 4 : index
    %c0_7 = arith.constant 0 : index
    %6 = vector.load %arg3[%c4, %c0_7] : memref<8x128xf32, #tpu.memory_space<vmem>>, vector<1x128xf32>
    %c5 = arith.constant 5 : index
    %c0_8 = arith.constant 0 : index
    %7 = vector.load %arg3[%c5, %c0_8] : memref<8x128xf32, #tpu.memory_space<vmem>>, vector<1x64xf32>
    %c6 = arith.constant 6 : index
    %c0_9 = arith.constant 0 : index
    %8 = vector.load %arg3[%c6, %c0_9] : memref<8x128xf32, #tpu.memory_space<vmem>>, vector<1x128xf32>
    %9 = arith.truncf %1 : vector<256x128xf32> to vector<256x128xbf16>
    %c0_10 = arith.constant 0 : index
    %c0_11 = arith.constant 0 : index
    %10 = vector.load %arg4[%c0_10, %c0_11] : memref<128x64xbf16, #tpu.memory_space<vmem>>, vector<128x64xbf16>
    %cst = arith.constant dense<0.000000e+00> : vector<256x64xf32>
    %11 = tpu.matmul %9, %10, %cst {dimension_numbers = #tpu.dot_dimension_numbers<[1], [0], [0], [1], [0, 0, 1, 1], [], []>} : vector<256x128xbf16>, vector<128x64xbf16>, vector<256x64xf32> -> vector<256x64xf32>
    %12 = vector.broadcast %3 : vector<1x64xf32> to vector<256x64xf32>
    %13 = arith.addf %11, %12 : vector<256x64xf32>
    %14 = math.tanh %13 : vector<256x64xf32>
    %15 = vector.shape_cast %14 : vector<256x64xf32> to vector<32x8x64xf32>
    %16 = vector.shape_cast %2 : vector<1x64xf32> to vector<1x1x64xf32>
    %17 = vector.broadcast %16 : vector<1x1x64xf32> to vector<32x8x64xf32>
    %18 = arith.mulf %15, %17 : vector<32x8x64xf32>
    %cst_12 = arith.constant dense<0.000000e+00> : vector<32x8xf32>
    %19 = vector.multi_reduction <add>, %18, %cst_12 [2] : vector<32x8x64xf32> to vector<32x8xf32>
    %cst_13 = arith.constant dense<0xFF800000> : vector<32xf32>
    %20 = vector.multi_reduction <maximumf>, %19, %cst_13 [1] : vector<32x8xf32> to vector<32xf32>
    %21 = vector.shape_cast %20 : vector<32xf32> to vector<32x1xf32>
    %22 = vector.broadcast %21 : vector<32x1xf32> to vector<32x8xf32>
    %23 = arith.subf %19, %22 : vector<32x8xf32>
    %24 = math.exp %23 : vector<32x8xf32>
    %cst_14 = arith.constant dense<0.000000e+00> : vector<32xf32>
    %25 = vector.multi_reduction <add>, %24, %cst_14 [1] : vector<32x8xf32> to vector<32xf32>
    %26 = vector.shape_cast %25 : vector<32xf32> to vector<32x1xf32>
    %27 = vector.broadcast %26 : vector<32x1xf32> to vector<32x8xf32>
    %28 = arith.divf %24, %27 : vector<32x8xf32>
    %29 = vector.shape_cast %28 : vector<32x8xf32> to vector<32x8x1xf32>
    %30 = vector.broadcast %29 : vector<32x8x1xf32> to vector<32x8x128xf32>
    %31 = arith.mulf %30, %0 : vector<32x8x128xf32>
    %cst_15 = arith.constant dense<0.000000e+00> : vector<32x128xf32>
    %32 = vector.multi_reduction <add>, %31, %cst_15 [1] : vector<32x8x128xf32> to vector<32x128xf32>
    %c0_16 = arith.constant 0 : index
    %c0_17 = arith.constant 0 : index
    %33 = vector.load %arg2[%c0_16, %c0_17] : memref<32x128xf32, #tpu.memory_space<vmem>>, vector<32x128xf32>
    %34 = arith.addf %32, %33 : vector<32x128xf32>
    %cst_18 = arith.constant dense<0.000000e+00> : vector<32xf32>
    %35 = vector.multi_reduction <add>, %34, %cst_18 [1] : vector<32x128xf32> to vector<32xf32>
    %36 = vector.shape_cast %35 : vector<32xf32> to vector<32x1xf32>
    %cst_19 = arith.constant 1.280000e+02 : f32
    %37 = vector.broadcast %cst_19 : f32 to vector<32x1xf32>
    %38 = arith.divf %36, %37 : vector<32x1xf32>
    %39 = vector.broadcast %38 : vector<32x1xf32> to vector<32x128xf32>
    %40 = arith.subf %34, %39 : vector<32x128xf32>
    %41 = arith.mulf %40, %40 : vector<32x128xf32>
    %cst_20 = arith.constant dense<0.000000e+00> : vector<32xf32>
    %42 = vector.multi_reduction <add>, %41, %cst_20 [1] : vector<32x128xf32> to vector<32xf32>
    %43 = vector.shape_cast %42 : vector<32xf32> to vector<32x1xf32>
    %cst_21 = arith.constant 1.280000e+02 : f32
    %44 = vector.broadcast %cst_21 : f32 to vector<32x1xf32>
    %45 = arith.divf %43, %44 : vector<32x1xf32>
    %46 = vector.broadcast %38 : vector<32x1xf32> to vector<32x128xf32>
    %47 = arith.subf %34, %46 : vector<32x128xf32>
    %cst_22 = arith.constant 9.99999974E-6 : f32
    %48 = vector.broadcast %cst_22 : f32 to vector<32x1xf32>
    %49 = arith.addf %45, %48 : vector<32x1xf32>
    %50 = math.rsqrt %49 : vector<32x1xf32>
    %51 = vector.broadcast %50 : vector<32x1xf32> to vector<32x128xf32>
    %52 = arith.mulf %47, %51 : vector<32x128xf32>
    %53 = vector.broadcast %4 : vector<1x128xf32> to vector<32x128xf32>
    %54 = arith.mulf %52, %53 : vector<32x128xf32>
    %55 = vector.broadcast %5 : vector<1x128xf32> to vector<32x128xf32>
    %56 = arith.addf %54, %55 : vector<32x128xf32>
    %57 = arith.truncf %56 : vector<32x128xf32> to vector<32x128xbf16>
    %c0_23 = arith.constant 0 : index
    %c0_24 = arith.constant 0 : index
    %58 = vector.load %arg5[%c0_23, %c0_24] : memref<128x128xbf16, #tpu.memory_space<vmem>>, vector<128x128xbf16>
    %cst_25 = arith.constant dense<0.000000e+00> : vector<32x128xf32>
    %59 = tpu.matmul %57, %58, %cst_25 {dimension_numbers = #tpu.dot_dimension_numbers<[1], [0], [0], [1], [0, 0, 1, 1], [], []>} : vector<32x128xbf16>, vector<128x128xbf16>, vector<32x128xf32> -> vector<32x128xf32>
    %60 = vector.broadcast %6 : vector<1x128xf32> to vector<32x128xf32>
    %61 = arith.addf %59, %60 : vector<32x128xf32>
    %cst_26 = arith.constant 5.000000e-01 : f32
    %62 = vector.broadcast %cst_26 : f32 to vector<32x128xf32>
    %63 = arith.mulf %62, %61 : vector<32x128xf32>
    %cst_27 = arith.constant 0.707106769 : f32
    %64 = vector.broadcast %cst_27 : f32 to vector<32x128xf32>
    %65 = arith.mulf %61, %64 : vector<32x128xf32>
    %66 = math.erf %65 : vector<32x128xf32>
    %cst_28 = arith.constant 1.000000e+00 : f32
    %67 = vector.broadcast %cst_28 : f32 to vector<32x128xf32>
    %68 = arith.addf %67, %66 : vector<32x128xf32>
    %69 = arith.mulf %63, %68 : vector<32x128xf32>
    %70 = arith.addf %69, %56 : vector<32x128xf32>
    %71 = arith.truncf %70 : vector<32x128xf32> to vector<32x128xbf16>
    %c0_29 = arith.constant 0 : index
    %c0_30 = arith.constant 0 : index
    %72 = vector.load %arg6[%c0_29, %c0_30] : memref<128x64xbf16, #tpu.memory_space<vmem>>, vector<128x64xbf16>
    %cst_31 = arith.constant dense<0.000000e+00> : vector<32x64xf32>
    %73 = tpu.matmul %71, %72, %cst_31 {dimension_numbers = #tpu.dot_dimension_numbers<[1], [0], [0], [1], [0, 0, 1, 1], [], []>} : vector<32x128xbf16>, vector<128x64xbf16>, vector<32x64xf32> -> vector<32x64xf32>
    %74 = vector.broadcast %7 : vector<1x64xf32> to vector<32x64xf32>
    %75 = arith.addf %73, %74 : vector<32x64xf32>
    %cst_32 = arith.constant 5.000000e-01 : f32
    %76 = vector.broadcast %cst_32 : f32 to vector<32x64xf32>
    %77 = arith.mulf %76, %75 : vector<32x64xf32>
    %cst_33 = arith.constant 0.707106769 : f32
    %78 = vector.broadcast %cst_33 : f32 to vector<32x64xf32>
    %79 = arith.mulf %75, %78 : vector<32x64xf32>
    %80 = math.erf %79 : vector<32x64xf32>
    %cst_34 = arith.constant 1.000000e+00 : f32
    %81 = vector.broadcast %cst_34 : f32 to vector<32x64xf32>
    %82 = arith.addf %81, %80 : vector<32x64xf32>
    %83 = arith.mulf %77, %82 : vector<32x64xf32>
    %84 = arith.truncf %83 : vector<32x64xf32> to vector<32x64xbf16>
    %c0_35 = arith.constant 0 : index
    %c0_36 = arith.constant 0 : index
    %85 = vector.load %arg7[%c0_35, %c0_36] : memref<64x128xbf16, #tpu.memory_space<vmem>>, vector<64x128xbf16>
    %cst_37 = arith.constant dense<0.000000e+00> : vector<32x128xf32>
    %86 = tpu.matmul %84, %85, %cst_37 {dimension_numbers = #tpu.dot_dimension_numbers<[1], [0], [0], [1], [0, 0, 1, 1], [], []>} : vector<32x64xbf16>, vector<64x128xbf16>, vector<32x128xf32> -> vector<32x128xf32>
    %87 = vector.broadcast %8 : vector<1x128xf32> to vector<32x128xf32>
    %88 = arith.addf %86, %87 : vector<32x128xf32>
    %c0_38 = arith.constant 0 : index
    %c0_39 = arith.constant 0 : index
    %89 = vector.load %arg8[%c0_38, %c0_39] : memref<32x128xf32, #tpu.memory_space<vmem>>, vector<32x128xf32>
    tpu.vector_store %arg8[%c0_38, %c0_39], %88 {strides = array<i32>} : memref<32x128xf32, #tpu.memory_space<vmem>>, vector<32x128xf32>,
    return
  }
  func.func @transform_0(%arg0: i32) -> (i32, i32, i32) {
    %c0_i32 = arith.constant 0 : i32
    %c0_i32_0 = arith.constant 0 : i32
    %c0_i32_1 = arith.constant 0 : i32
    return %arg0, %c0_i32, %c0_i32_0 : i32, i32, i32
  }
  func.func @transform_1(%arg0: i32) -> (i32, i32) {
    %c0_i32 = arith.constant 0 : i32
    %c0_i32_0 = arith.constant 0 : i32
    return %arg0, %c0_i32 : i32, i32
  }
  func.func @transform_2(%arg0: i32) -> (i32, i32) {
    %c0_i32 = arith.constant 0 : i32
    %c0_i32_0 = arith.constant 0 : i32
    %c0_i32_1 = arith.constant 0 : i32
    return %c0_i32, %c0_i32_0 : i32, i32
  }
  func.func @transform_3(%arg0: i32) -> (i32, i32) {
    %c0_i32 = arith.constant 0 : i32
    %c0_i32_0 = arith.constant 0 : i32
    %c0_i32_1 = arith.constant 0 : i32
    return %c0_i32, %c0_i32_0 : i32, i32
  }
  func.func @transform_4(%arg0: i32) -> (i32, i32) {
    %c0_i32 = arith.constant 0 : i32
    %c0_i32_0 = arith.constant 0 : i32
    %c0_i32_1 = arith.constant 0 : i32
    return %c0_i32, %c0_i32_0 : i32, i32
  }
  func.func @transform_5(%arg0: i32) -> (i32, i32) {
    %c0_i32 = arith.constant 0 : i32
    %c0_i32_0 = arith.constant 0 : i32
    %c0_i32_1 = arith.constant 0 : i32
    return %c0_i32, %c0_i32_0 : i32, i32
  }
  func.func @transform_6(%arg0: i32) -> (i32, i32) {
    %c0_i32 = arith.constant 0 : i32
    %c0_i32_0 = arith.constant 0 : i32
    %c0_i32_1 = arith.constant 0 : i32
    return %c0_i32, %c0_i32_0 : i32, i32
  }
  func.func @transform_7(%arg0: i32) -> (i32, i32) {
    %c0_i32 = arith.constant 0 : i32
    %c0_i32_0 = arith.constant 0 : i32
    return %arg0, %c0_i32 : i32, i32
  }
}

</mosaic_0001>

<llo_original>
// kernel: head.1
$region0: #{head.1}
  #allocation0 [shape = 'u32[]', space=smem, size = 0x4, offset = 0x4, fixed_abs, tag = 'smem constant byte address 0x4 - core index']
  #allocation1 [shape = 'u32[144,128]{1,0:T(1,128)}', space=vmem, size = 0x12000, scoped, tag = 'internal scratch']
  %s0 = inlined_call_operand.hbm [shape: f32[32,8,128], index: 0, kind: input, shape index: {}]
  %s1 = inlined_call_operand.hbm [shape: f32[32,128], index: 1, kind: input, shape index: {}]
  %s2 = inlined_call_operand.hbm [shape: f32[8,128], index: 2, kind: input, shape index: {}]
  %s3 = inlined_call_operand.hbm [shape: bf16[128,64], index: 3, kind: input, shape index: {}]
  %s4 = inlined_call_operand.hbm [shape: bf16[128,128], index: 4, kind: input, shape index: {}]
  %s5 = inlined_call_operand.hbm [shape: bf16[128,64], index: 5, kind: input, shape index: {}]
  %s6 = inlined_call_operand.vmem [shape: bf16[64,128], index: 6, kind: input, shape index: {}]
  %s7 = inlined_call_operand.vmem [shape: f32[32,128], index: 7, kind: output, shape index: {}]
  %s8 = sld [smem:[#allocation0]]
  $region62: #{head.1} parent=0
    _
  %s10 = ssub.s32 1, %s8
  %s11 = scalar_select 0, %s10, %s8
  $region1: #{head.1} parent=0
    #allocation2 [shape = 'u8[131072]{0}', space=vmem, size = 0x20000, scoped, tag = 'input window, operand 0, single buffered']
    #allocation3 [shape = 's32[1]{0}', space=sflag, size = 0x4, scoped, tag = 'scoped memory for head.1']
    #allocation4 [shape = 'u8[16384]{0}', space=vmem, size = 0x4000, scoped, tag = 'input window, operand 1, single buffered']
    #allocation5 [shape = 's32[1]{0}', space=sflag, size = 0x4, scoped, tag = 'scoped memory for head.1']
    #allocation6 [shape = 'u8[4096]{0}', space=vmem, size = 0x1000, scoped, tag = 'input window, operand 2, single buffered']
    #allocation7 [shape = 'u8[32768]{0}', space=vmem, size = 0x8000, scoped, tag = 'input window, operand 3, single buffered']
    #allocation8 [shape = 's32[1]{0}', space=sflag, size = 0x4, scoped, tag = 'scoped memory for head.1']
    #allocation9 [shape = 'u8[32768]{0}', space=vmem, size = 0x8000, scoped, tag = 'input window, operand 4, single buffered']
    #allocation10 [shape = 'u8[32768]{0}', space=vmem, size = 0x8000, scoped, tag = 'input window, operand 5, single buffered']
    #allocation11 [shape = 's32[1]{0}', space=sflag, size = 0x4, scoped, tag = 'scoped memory for head.1']
    %12 = vsyncpa [#allocation3], 0
    %13 = vsyncpa [#allocation5], 0
    %14 = vsyncpa [#allocation8], 0
    %15 = vsyncpa [#allocation11], 0
    // Predicated region
    $region2: #{head.1} parent=1 // pred_check
      _
    $region3: #{head.1} parent=1 // pred_check_branch
      %17 = sbr.rel (0) target = $region5
    $region4: #{head.1} parent=1 // pred_region
      %s19 = ssub.s32 4096, 4096
      %20 = vsyncadd [#allocation3], %s19
      %s21 = sshll.u32 [#allocation2], 4
      %s22 = int_to_ptr.vmem [resolvable:$true] %s21
      %27 = dma.hbm_to_vmem [thread:$0]  %s0, 4096, %s22, [#allocation3], 128, 128, 8
    $region5: #{head.1} parent=1 // pred_fallthru
      _
    // Predicated region
    $region6: #{head.1} parent=1 // pred_check
      _
    $region7: #{head.1} parent=1 // pred_check_branch
      %29 = sbr.rel (0) target = $region9
    $region8: #{head.1} parent=1 // pred_region
      %s31 = ssub.s32 512, 512
      %32 = vsyncadd [#allocation5], %s31
      %s33 = sshll.u32 [#allocation4], 4
      %s34 = int_to_ptr.vmem [resolvable:$true] %s33
      %39 = dma.hbm_to_vmem [thread:$0]  %s1, 512, %s34, [#allocation5], 128, 128, 8
    $region9: #{head.1} parent=1 // pred_fallthru
      _
    // Predicated region
    $region10: #{head.1} parent=1 // pred_check
      _
    $region11: #{head.1} parent=1 // pred_check_branch
      %41 = sbr.rel (0) target = $region13
    $region12: #{head.1} parent=1 // pred_region
      %s43 = ssub.s32 128, 128
      %44 = vsyncadd [#allocation5], %s43
      %s46 = sshll.u32 [#allocation6], 4
      %s47 = int_to_ptr.vmem [resolvable:$true] %s46
      %49 = dma.hbm_to_vmem [thread:$0]  %s2, 128, %s47, [#allocation5]
    $region13: #{head.1} parent=1 // pred_fallthru
      _
    // Predicated region
    $region14: #{head.1} parent=1 // pred_check
      _
    $region15: #{head.1} parent=1 // pred_check_branch
      %51 = sbr.rel (0) target = $region17
    $region16: #{head.1} parent=1 // pred_region
      %s53 = ssub.s32 1024, 1024
      %54 = vsyncadd [#allocation8], %s53
      %s55 = sshll.u32 [#allocation7], 4
      %s56 = int_to_ptr.vmem [resolvable:$true] %s55
      %61 = dma.hbm_to_vmem [thread:$0]  %s3, 1024, %s56, [#allocation8], 64, 64, 4
    $region17: #{head.1} parent=1 // pred_fallthru
      _
    // Predicated region
    $region18: #{head.1} parent=1 // pred_check
      _
    $region19: #{head.1} parent=1 // pred_check_branch
      %63 = sbr.rel (0) target = $region21
    $region20: #{head.1} parent=1 // pred_region
      %s65 = ssub.s32 1024, 1024
      %66 = vsyncadd [#allocation8], %s65
      %s67 = sshll.u32 [#allocation9], 4
      %s68 = int_to_ptr.vmem [resolvable:$true] %s67
      %73 = dma.hbm_to_vmem [thread:$0]  %s4, 1024, %s68, [#allocation8], 64, 64, 4
    $region21: #{head.1} parent=1 // pred_fallthru
      _
    // Predicated region
    $region22: #{head.1} parent=1 // pred_check
      _
    $region23: #{head.1} parent=1 // pred_check_branch
      %75 = sbr.rel (0) target = $region25
    $region24: #{head.1} parent=1 // pred_region
      %s77 = ssub.s32 1024, 1024
      %78 = vsyncadd [#allocation11], %s77
      %s79 = sshll.u32 [#allocation10], 4
      %s80 = int_to_ptr.vmem [resolvable:$true] %s79
      %85 = dma.hbm_to_vmem [thread:$0]  %s5, 1024, %s80, [#allocation11], 64, 64, 4
    $region25: #{head.1} parent=1 // pred_fallthru
      _
    // Predicated region
    $region26: #{head.1} parent=1 // pred_check
      _
    $region27: #{head.1} parent=1 // pred_check_branch
      %87 = sbr.rel (0) target = $region29
    $region28: #{head.1} parent=1 // pred_region
      _
    $region29: #{head.1} parent=1 // pred_fallthru
      _
    // Predicated region
    $region30: #{head.1} parent=1 // pred_check
      _
    $region31: #{head.1} parent=1 // pred_check_branch
      %89 = sbr.rel (0) target = $region33
    $region32: #{head.1} parent=1 // pred_region
      %90 = dma.done [#allocation3], 4096
    $region33: #{head.1} parent=1 // pred_fallthru
      _
    // Predicated region
    $region34: #{head.1} parent=1 // pred_check
      _
    $region35: #{head.1} parent=1 // pred_check_branch
      %92 = sbr.rel (0) target = $region37
    $region36: #{head.1} parent=1 // pred_region
      %93 = dma.done [#allocation5], 512
    $region37: #{head.1} parent=1 // pred_fallthru
      _
    // Predicated region
    $region38: #{head.1} parent=1 // pred_check
      _
    $region39: #{head.1} parent=1 // pred_check_branch
      %95 = sbr.rel (0) target = $region41
    $region40: #{head.1} parent=1 // pred_region
      %96 = dma.done [#allocation5], 128
    $region41: #{head.1} parent=1 // pred_fallthru
      _
    // Predicated region
    $region42: #{head.1} parent=1 // pred_check
      _
    $region43: #{head.1} parent=1 // pred_check_branch
      %98 = sbr.rel (0) target = $region45
    $region44: #{head.1} parent=1 // pred_region
      %99 = dma.done [#allocation8], 1024
    $region45: #{head.1} parent=1 // pred_fallthru
      _
    // Predicated region
    $region46: #{head.1} parent=1 // pred_check
      _
    $region47: #{head.1} parent=1 // pred_check_branch
      %101 = sbr.rel (0) target = $region49
    $region48: #{head.1} parent=1 // pred_region
      %102 = dma.done [#allocation8], 1024
    $region49: #{head.1} parent=1 // pred_fallthru
      _
    // Predicated region
    $region50: #{head.1} parent=1 // pred_check
      _
    $region51: #{head.1} parent=1 // pred_check_branch
      %104 = sbr.rel (0) target = $region53
    $region52: #{head.1} parent=1 // pred_region
      %105 = dma.done [#allocation11], 1024
    $region53: #{head.1} parent=1 // pred_fallthru
      _
    %v107 = vld [vmem:[#allocation2] sm:$0xff]
    %v108 = vld [vmem:[#allocation2 + $0x8] sm:$0xff]
    %v109 = vld [vmem:[#allocation2 + $0x10] sm:$0xff]
    %v110 = vld [vmem:[#allocation2 + $0x18] sm:$0xff]
    %v111 = vld [vmem:[#allocation2 + $0x20] sm:$0xff]
    %v112 = vld [vmem:[#allocation2 + $0x28] sm:$0xff]
    %v113 = vld [vmem:[#allocation2 + $0x30] sm:$0xff]
    %v114 = vld [vmem:[#allocation2 + $0x38] sm:$0xff]
    %v115 = vld [vmem:[#allocation2 + $0x40] sm:$0xff]
    %v116 = vld [vmem:[#allocation2 + $0x48] sm:$0xff]
    %v117 = vld [vmem:[#allocation2 + $0x50] sm:$0xff]
    %v118 = vld [vmem:[#allocation2 + $0x58] sm:$0xff]
    %v119 = vld [vmem:[#allocation2 + $0x60] sm:$0xff]
    %v120 = vld [vmem:[#allocation2 + $0x68] sm:$0xff]
    %v121 = vld [vmem:[#allocation2 + $0x70] sm:$0xff]
    %v122 = vld [vmem:[#allocation2 + $0x78] sm:$0xff]
    %v123 = vld [vmem:[#allocation2 + $0x80] sm:$0xff]
    %v124 = vld [vmem:[#allocation2 + $0x88] sm:$0xff]
    %v125 = vld [vmem:[#allocation2 + $0x90] sm:$0xff]
    %v126 = vld [vmem:[#allocation2 + $0x98] sm:$0xff]
    %v127 = vld [vmem:[#allocation2 + $0xa0] sm:$0xff]
    %v128 = vld [vmem:[#allocation2 + $0xa8] sm:$0xff]
    %v129 = vld [vmem:[#allocation2 + $0xb0] sm:$0xff]
    %v130 = vld [vmem:[#allocation2 + $0xb8] sm:$0xff]
    %v131 = vld [vmem:[#allocation2 + $0xc0] sm:$0xff]
    %v132 = vld [vmem:[#allocation2 + $0xc8] sm:$0xff]
    %v133 = vld [vmem:[#allocation2 + $0xd0] sm:$0xff]
    %v134 = vld [vmem:[#allocation2 + $0xd8] sm:$0xff]
    %v135 = vld [vmem:[#allocation2 + $0xe0] sm:$0xff]
    %v136 = vld [vmem:[#allocation2 + $0xe8] sm:$0xff]
    %v137 = vld [vmem:[#allocation2 + $0xf0] sm:$0xff]
    %v138 = vld [vmem:[#allocation2 + $0xf8] sm:$0xff]
    %v139 = vld [vmem:[#allocation6] sm:$0x1]
    %v140 = vld [vmem:[#allocation6 + $0x1] sm:$0x1]
    %v141 = vld [vmem:[#allocation6 + $0x2] sm:$0x1]
    %v142 = vld [vmem:[#allocation6 + $0x3] sm:$0x1]
    %v143 = vld [vmem:[#allocation6 + $0x4] sm:$0x1]
    %v144 = vld [vmem:[#allocation6 + $0x5] sm:$0x1]
    %v145 = vld [vmem:[#allocation6 + $0x6] sm:$0x1]
    %v146 = vpack.c.bf16 %v108, %v107
    %v147 = vpack.c.bf16 %v110, %v109
    %v148 = vpack.c.bf16 %v112, %v111
    %v149 = vpack.c.bf16 %v114, %v113
    %v150 = vpack.c.bf16 %v116, %v115
    %v151 = vpack.c.bf16 %v118, %v117
    %v152 = vpack.c.bf16 %v120, %v119
    %v153 = vpack.c.bf16 %v122, %v121
    %v154 = vpack.c.bf16 %v124, %v123
    %v155 = vpack.c.bf16 %v126, %v125
    %v156 = vpack.c.bf16 %v128, %v127
    %v157 = vpack.c.bf16 %v130, %v129
    %v158 = vpack.c.bf16 %v132, %v131
    %v159 = vpack.c.bf16 %v134, %v133
    %v160 = vpack.c.bf16 %v136, %v135
    %v161 = vpack.c.bf16 %v138, %v137
    %v162 = vld [vmem:[#allocation7] sm:$0xf]
    %v163 = vld [vmem:[#allocation7 + $0x4] sm:$0xf]
    %v164 = vld [vmem:[#allocation7 + $0x8] sm:$0xf]
    %v165 = vld [vmem:[#allocation7 + $0xc] sm:$0xf]
    %v166 = vld [vmem:[#allocation7 + $0x10] sm:$0xf]
    %v167 = vld [vmem:[#allocation7 + $0x14] sm:$0xf]
    %v168 = vld [vmem:[#allocation7 + $0x18] sm:$0xf]
    %v169 = vld [vmem:[#allocation7 + $0x1c] sm:$0xf]
    %v170 = vld [vmem:[#allocation7 + $0x20] sm:$0xf]
    %v171 = vld [vmem:[#allocation7 + $0x24] sm:$0xf]
    %v172 = vld [vmem:[#allocation7 + $0x28] sm:$0xf]
    %v173 = vld [vmem:[#allocation7 + $0x2c] sm:$0xf]
    %v174 = vld [vmem:[#allocation7 + $0x30] sm:$0xf]
    %v175 = vld [vmem:[#allocation7 + $0x34] sm:$0xf]
    %v176 = vld [vmem:[#allocation7 + $0x38] sm:$0xf]
    %v177 = vld [vmem:[#allocation7 + $0x3c] sm:$0xf]
    %v178 = vlaneseq
    %v179 = vshrl.u32 %v178, 7
    %v180 = vsub.s32 0, %v179
    %v181 = vrot.slane %v140, %v180
    %v198 = vunpack.c.l.b16 %v162
    %v199 = vunpack.c.l.b16 %v163
    %v200 = vunpack.c.l.b16 %v164
    %v201 = vunpack.c.l.b16 %v165
    %v202 = vunpack.c.l.b16 %v166
    %v203 = vunpack.c.l.b16 %v167
    %v204 = vunpack.c.l.b16 %v168
    %v205 = vunpack.c.l.b16 %v169
    %v206 = vunpack.c.l.b16 %v170
    %v207 = vunpack.c.l.b16 %v171
    %v208 = vunpack.c.l.b16 %v172
    %v209 = vunpack.c.l.b16 %v173
    %v210 = vunpack.c.l.b16 %v174
    %v211 = vunpack.c.l.b16 %v175
    %v212 = vunpack.c.l.b16 %v176
    %v213 = vunpack.c.l.b16 %v177
    %v214 = vpack.c.b16 %v199, %v198
    %v215 = vpack.c.b16 %v201, %v200
    %v216 = vpack.c.b16 %v203, %v202
    %v217 = vpack.c.b16 %v205, %v204
    %v218 = vpack.c.b16 %v207, %v206
    %v219 = vpack.c.b16 %v209, %v208
    %v220 = vpack.c.b16 %v211, %v210
    %v221 = vpack.c.b16 %v213, %v212
    %230 = vmatprep.subr.bf16.mxu0 0
    %231 = vmatpush1.bf16.msra.mxu0 %v214
    %232 = vmatprep.subr.bf16.mxu0 0
    %233 = vmatpush1.bf16.msra.mxu0 %v215
    %234 = vmatprep.subr.bf16.mxu0 0
    %235 = vmatpush1.bf16.msra.mxu0 %v216
    %236 = vmatprep.subr.bf16.mxu0 0
    %237 = vmatpush1.bf16.msra.mxu0 %v217
    %238 = vmatprep.subr.bf16.mxu0 0
    %239 = vmatpush1.bf16.msra.mxu0 %v218
    %240 = vmatprep.subr.bf16.mxu0 0
    %241 = vmatpush1.bf16.msra.mxu0 %v219
    %242 = vmatprep.subr.bf16.mxu0 0
    %243 = vmatpush1.bf16.msra.mxu0 %v220
    %244 = vmatprep.subr.bf16.mxu0 0
    %245 = vmatpush1.bf16.msra.mxu0 %v221
    %246 = vmatprep.subr.bf16.mxu0 0
    %247 = vmatpush1.bf16.msra.mxu0 0
    %248 = vmatprep.subr.bf16.mxu0 0
    %249 = vmatpush1.bf16.msra.mxu0 0
    %250 = vmatprep.subr.bf16.mxu0 0
    %251 = vmatpush1.bf16.msra.mxu0 0
    %252 = vmatprep.subr.bf16.mxu0 0
    %253 = vmatpush1.bf16.msra.mxu0 0
    %254 = vmatprep.subr.bf16.mxu0 0
    %255 = vmatpush1.bf16.msra.mxu0 0
    %256 = vmatprep.subr.bf16.mxu0 0
    %257 = vmatpush1.bf16.msra.mxu0 0
    %258 = vmatprep.subr.bf16.mxu0 0
    %259 = vmatpush1.bf16.msra.mxu0 0
    %260 = vmatprep.subr.bf16.mxu0 0
    %261 = vmatpush1.bf16.msra.mxu0 0
    %262 = vmatprep.mubr.bf16.mxu0 0
    %263 = vmatmul.mubr.bf16.gmra.mrb[0].mxu0 %v146
    %v264 = vpop.f32.mrb[0].mxu0
    %v265 = vadd.f32 %v181, %v264
    %v266 = vpop.f32.mrb[0].mxu0
    %v267 = vpop.f32.mrb[0].mxu0
    %v268 = vadd.f32 %v181, %v267
    %v269 = vpop.f32.mrb[0].mxu0
    %270 = vmatprep.mubr.bf16.mxu0 0
    %271 = vmatmul.mubr.bf16.gmra.mrb[0].mxu0 %v147
    %v272 = vpop.f32.mrb[0].mxu0
    %v273 = vadd.f32 %v181, %v272
    %v274 = vpop.f32.mrb[0].mxu0
    %v275 = vpop.f32.mrb[0].mxu0
    %v276 = vadd.f32 %v181, %v275
    %v277 = vpop.f32.mrb[0].mxu0
    %278 = vmatprep.mubr.bf16.mxu0 0
    %279 = vmatmul.mubr.bf16.gmra.mrb[0].mxu0 %v148
    %v280 = vpop.f32.mrb[0].mxu0
    %v281 = vadd.f32 %v181, %v280
    %v282 = vpop.f32.mrb[0].mxu0
    %v283 = vpop.f32.mrb[0].mxu0
    %v284 = vadd.f32 %v181, %v283
    %v285 = vpop.f32.mrb[0].mxu0
    %286 = vmatprep.mubr.bf16.mxu0 0
    %287 = vmatmul.mubr.bf16.gmra.mrb[0].mxu0 %v149
    %v288 = vpop.f32.mrb[0].mxu0
    %v289 = vadd.f32 %v181, %v288
    %v290 = vpop.f32.mrb[0].mxu0
    %v291 = vpop.f32.mrb[0].mxu0
    %v292 = vadd.f32 %v181, %v291
    %v293 = vpop.f32.mrb[0].mxu0
    %294 = vmatprep.mubr.bf16.mxu0 0
    %295 = vmatmul.mubr.bf16.gmra.mrb[0].mxu0 %v150
    %v296 = vpop.f32.mrb[0].mxu0
    %v297 = vadd.f32 %v181, %v296
    %v298 = vpop.f32.mrb[0].mxu0
    %v299 = vpop.f32.mrb[0].mxu0
    %v300 = vadd.f32 %v181, %v299
    %v301 = vpop.f32.mrb[0].mxu0
    %302 = vmatprep.mubr.bf16.mxu0 0
    %303 = vmatmul.mubr.bf16.gmra.mrb[0].mxu0 %v151
    %v304 = vpop.f32.mrb[0].mxu0
    %v305 = vadd.f32 %v181, %v304
    %v306 = vpop.f32.mrb[0].mxu0
    %v307 = vpop.f32.mrb[0].mxu0
    %v308 = vadd.f32 %v181, %v307
    %v309 = vpop.f32.mrb[0].mxu0
    %310 = vmatprep.mubr.bf16.mxu0 0
    %311 = vmatmul.mubr.bf16.gmra.mrb[0].mxu0 %v152
    %v312 = vpop.f32.mrb[0].mxu0
    %v313 = vadd.f32 %v181, %v312
    %v314 = vpop.f32.mrb[0].mxu0
    %v315 = vpop.f32.mrb[0].mxu0
    %v316 = vadd.f32 %v181, %v315
    %v317 = vpop.f32.mrb[0].mxu0
    %318 = vmatprep.mubr.bf16.mxu0 0
    %319 = vmatmul.mubr.bf16.gmra.mrb[0].mxu0 %v153
    %v320 = vpop.f32.mrb[0].mxu0
    %v321 = vadd.f32 %v181, %v320
    %v322 = vpop.f32.mrb[0].mxu0
    %v323 = vpop.f32.mrb[0].mxu0
    %v324 = vadd.f32 %v181, %v323
    %v325 = vpop.f32.mrb[0].mxu0
    %326 = vmatprep.mubr.bf16.mxu0 0
    %327 = vmatmul.mubr.bf16.gmra.mrb[0].mxu0 %v154
    %v328 = vpop.f32.mrb[0].mxu0
    %v329 = vadd.f32 %v181, %v328
    %v330 = vpop.f32.mrb[0].mxu0
    %v331 = vpop.f32.mrb[0].mxu0
    %v332 = vadd.f32 %v181, %v331
    %v333 = vpop.f32.mrb[0].mxu0
    %334 = vmatprep.mubr.bf16.mxu0 0
    %335 = vmatmul.mubr.bf16.gmra.mrb[0].mxu0 %v155
    %v336 = vpop.f32.mrb[0].mxu0
    %v337 = vadd.f32 %v181, %v336
    %v338 = vpop.f32.mrb[0].mxu0
    %v339 = vpop.f32.mrb[0].mxu0
    %v340 = vadd.f32 %v181, %v339
    %v341 = vpop.f32.mrb[0].mxu0
    %342 = vmatprep.mubr.bf16.mxu0 0
    %343 = vmatmul.mubr.bf16.gmra.mrb[0].mxu0 %v156
    %v344 = vpop.f32.mrb[0].mxu0
    %v345 = vadd.f32 %v181, %v344
    %v346 = vpop.f32.mrb[0].mxu0
    %v347 = vpop.f32.mrb[0].mxu0
    %v348 = vadd.f32 %v181, %v347
    %v349 = vpop.f32.mrb[0].mxu0
    %350 = vmatprep.mubr.bf16.mxu0 0
    %351 = vmatmul.mubr.bf16.gmra.mrb[0].mxu0 %v157
    %v352 = vpop.f32.mrb[0].mxu0
    %v353 = vadd.f32 %v181, %v352
    %v354 = vpop.f32.mrb[0].mxu0
    %v355 = vpop.f32.mrb[0].mxu0
    %v356 = vadd.f32 %v181, %v355
    %v357 = vpop.f32.mrb[0].mxu0
    %358 = vmatprep.mubr.bf16.mxu0 0
    %359 = vmatmul.mubr.bf16.gmra.mrb[0].mxu0 %v158
    %v360 = vpop.f32.mrb[0].mxu0
    %v361 = vadd.f32 %v181, %v360
    %v362 = vpop.f32.mrb[0].mxu0
    %v363 = vpop.f32.mrb[0].mxu0
    %v364 = vadd.f32 %v181, %v363
    %v365 = vpop.f32.mrb[0].mxu0
    %366 = vmatprep.mubr.bf16.mxu0 0
    %367 = vmatmul.mubr.bf16.gmra.mrb[0].mxu0 %v159
    %v368 = vpop.f32.mrb[0].mxu0
    %v369 = vadd.f32 %v181, %v368
    %v370 = vpop.f32.mrb[0].mxu0
    %v371 = vpop.f32.mrb[0].mxu0
    %v372 = vadd.f32 %v181, %v371
    %v373 = vpop.f32.mrb[0].mxu0
    %374 = vmatprep.mubr.bf16.mxu0 0
    %375 = vmatmul.mubr.bf16.gmra.mrb[0].mxu0 %v160
    %v376 = vpop.f32.mrb[0].mxu0
    %v377 = vadd.f32 %v181, %v376
    %v378 = vpop.f32.mrb[0].mxu0
    %v379 = vpop.f32.mrb[0].mxu0
    %v380 = vadd.f32 %v181, %v379
    %v381 = vpop.f32.mrb[0].mxu0
    %382 = vmatprep.mubr.bf16.mxu0 0
    %383 = vmatmul.mubr.bf16.gmra.mrb[0].mxu0 %v161
    %v384 = vpop.f32.mrb[0].mxu0
    %v385 = vadd.f32 %v181, %v384
    %v386 = vpop.f32.mrb[0].mxu0
    %v387 = vpop.f32.mrb[0].mxu0
    %v388 = vadd.f32 %v181, %v387
    %v389 = vpop.f32.mrb[0].mxu0
    %390 = vdwg.mxu0
    %v391 = vtanh.pop %v265
    %v392 = vtanh.pop %v268
    %v393 = vtanh.pop %v273
    %v394 = vtanh.pop %v276
    %v395 = vtanh.pop %v281
    %v396 = vtanh.pop %v284
    %v397 = vtanh.pop %v289
    %v398 = vtanh.pop %v292
    %v399 = vtanh.pop %v297
    %v400 = vtanh.pop %v300
    %v401 = vtanh.pop %v305
    %v402 = vtanh.pop %v308
    %v403 = vtanh.pop %v313
    %v404 = vtanh.pop %v316
    %v405 = vtanh.pop %v321
    %v406 = vtanh.pop %v324
    %v407 = vtanh.pop %v329
    %v408 = vtanh.pop %v332
    %v409 = vtanh.pop %v337
    %v410 = vtanh.pop %v340
    %v411 = vtanh.pop %v345
    %v412 = vtanh.pop %v348
    %v413 = vtanh.pop %v353
    %v414 = vtanh.pop %v356
    %v415 = vtanh.pop %v361
    %v416 = vtanh.pop %v364
    %v417 = vtanh.pop %v369
    %v418 = vtanh.pop %v372
    %v419 = vtanh.pop %v377
    %v420 = vtanh.pop %v380
    %v421 = vtanh.pop %v385
    %v422 = vtanh.pop %v388
    %v423 = vlaneseq
    %v424 = vshrl.u32 %v423, 7
    %v425 = vsub.s32 0, %v424
    %v426 = vrot.slane %v139, %v425
    %v427 = vmul.f32 %v391, %v426
    %v428 = vmul.f32 %v392, %v426
    %v429 = vmul.f32 %v393, %v426
    %v430 = vmul.f32 %v394, %v426
    %v431 = vmul.f32 %v395, %v426
    %v432 = vmul.f32 %v396, %v426
    %v433 = vmul.f32 %v397, %v426
    %v434 = vmul.f32 %v398, %v426
    %v435 = vmul.f32 %v399, %v426
    %v436 = vmul.f32 %v400, %v426
    %v437 = vmul.f32 %v401, %v426
    %v438 = vmul.f32 %v402, %v426
    %v439 = vmul.f32 %v403, %v426
    %v440 = vmul.f32 %v404, %v426
    %v441 = vmul.f32 %v405, %v426
    %v442 = vmul.f32 %v406, %v426
    %v443 = vmul.f32 %v407, %v426
    %v444 = vmul.f32 %v408, %v426
    %v445 = vmul.f32 %v409, %v426
    %v446 = vmul.f32 %v410, %v426
    %v447 = vmul.f32 %v411, %v426
    %v448 = vmul.f32 %v412, %v426
    %v449 = vmul.f32 %v413, %v426
    %v450 = vmul.f32 %v414, %v426
    %v451 = vmul.f32 %v415, %v426
    %v452 = vmul.f32 %v416, %v426
    %v453 = vmul.f32 %v417, %v426
    %v454 = vmul.f32 %v418, %v426
    %v455 = vmul.f32 %v419, %v426
    %v456 = vmul.f32 %v420, %v426
    %v457 = vmul.f32 %v421, %v426
    %v458 = vmul.f32 %v422, %v426
    %vm459 = vcmask 523264
    %v460 = vsel %vm459, %v427, 0.0
    %461 = vadd.xlane.f32.xlu0 %v460
    %v462 = vpop.xlane.xlu0 %461
    %v463 = vsel %vm459, %v428, 0.0
    %464 = vadd.xlane.f32.xlu0 %v463
    %v465 = vpop.xlane.xlu0 %464
    %v466 = vsel %vm459, %v429, 0.0
    %467 = vadd.xlane.f32.xlu0 %v466
    %v468 = vpop.xlane.xlu0 %467
    %v469 = vsel %vm459, %v430, 0.0
    %470 = vadd.xlane.f32.xlu0 %v469
    %v471 = vpop.xlane.xlu0 %470
    %v472 = vsel %vm459, %v431, 0.0
    %473 = vadd.xlane.f32.xlu0 %v472
    %v474 = vpop.xlane.xlu0 %473
    %v475 = vsel %vm459, %v432, 0.0
    %476 = vadd.xlane.f32.xlu0 %v475
    %v477 = vpop.xlane.xlu0 %476
    %v478 = vsel %vm459, %v433, 0.0
    %479 = vadd.xlane.f32.xlu0 %v478
    %v480 = vpop.xlane.xlu0 %479
    %v481 = vsel %vm459, %v434, 0.0
    %482 = vadd.xlane.f32.xlu0 %v481
    %v483 = vpop.xlane.xlu0 %482
    %v484 = vsel %vm459, %v435, 0.0
    %485 = vadd.xlane.f32.xlu0 %v484
    %v486 = vpop.xlane.xlu0 %485
    %v487 = vsel %vm459, %v436, 0.0
    %488 = vadd.xlane.f32.xlu0 %v487
    %v489 = vpop.xlane.xlu0 %488
    %v490 = vsel %vm459, %v437, 0.0
    %491 = vadd.xlane.f32.xlu0 %v490
    %v492 = vpop.xlane.xlu0 %491
    %v493 = vsel %vm459, %v438, 0.0
    %494 = vadd.xlane.f32.xlu0 %v493
    %v495 = vpop.xlane.xlu0 %494
    %v496 = vsel %vm459, %v439, 0.0
    %497 = vadd.xlane.f32.xlu0 %v496
    %v498 = vpop.xlane.xlu0 %497
    %v499 = vsel %vm459, %v440, 0.0
    %500 = vadd.xlane.f32.xlu0 %v499
    %v501 = vpop.xlane.xlu0 %500
    %v502 = vsel %vm459, %v441, 0.0
    %503 = vadd.xlane.f32.xlu0 %v502
    %v504 = vpop.xlane.xlu0 %503
    %v505 = vsel %vm459, %v442, 0.0
    %506 = vadd.xlane.f32.xlu0 %v505
    %v507 = vpop.xlane.xlu0 %506
    %v508 = vsel %vm459, %v443, 0.0
    %509 = vadd.xlane.f32.xlu0 %v508
    %v510 = vpop.xlane.xlu0 %509
    %v511 = vsel %vm459, %v444, 0.0
    %512 = vadd.xlane.f32.xlu0 %v511
    %v513 = vpop.xlane.xlu0 %512
    %v514 = vsel %vm459, %v445, 0.0
    %515 = vadd.xlane.f32.xlu0 %v514
    %v516 = vpop.xlane.xlu0 %515
    %v517 = vsel %vm459, %v446, 0.0
    %518 = vadd.xlane.f32.xlu0 %v517
    %v519 = vpop.xlane.xlu0 %518
    %v520 = vsel %vm459, %v447, 0.0
    %521 = vadd.xlane.f32.xlu0 %v520
    %v522 = vpop.xlane.xlu0 %521
    %v523 = vsel %vm459, %v448, 0.0
    %524 = vadd.xlane.f32.xlu0 %v523
    %v525 = vpop.xlane.xlu0 %524
    %v526 = vsel %vm459, %v449, 0.0
    %527 = vadd.xlane.f32.xlu0 %v526
    %v528 = vpop.xlane.xlu0 %527
    %v529 = vsel %vm459, %v450, 0.0
    %530 = vadd.xlane.f32.xlu0 %v529
    %v531 = vpop.xlane.xlu0 %530
    %v532 = vsel %vm459, %v451, 0.0
    %533 = vadd.xlane.f32.xlu0 %v532
    %v534 = vpop.xlane.xlu0 %533
    %v535 = vsel %vm459, %v452, 0.0
    %536 = vadd.xlane.f32.xlu0 %v535
    %v537 = vpop.xlane.xlu0 %536
    %v538 = vsel %vm459, %v453, 0.0
    %539 = vadd.xlane.f32.xlu0 %v538
    %v540 = vpop.xlane.xlu0 %539
    %v541 = vsel %vm459, %v454, 0.0
    %542 = vadd.xlane.f32.xlu0 %v541
    %v543 = vpop.xlane.xlu0 %542
    %v544 = vsel %vm459, %v455, 0.0
    %545 = vadd.xlane.f32.xlu0 %v544
    %v546 = vpop.xlane.xlu0 %545
    %v547 = vsel %vm459, %v456, 0.0
    %548 = vadd.xlane.f32.xlu0 %v547
    %v549 = vpop.xlane.xlu0 %548
    %v550 = vsel %vm459, %v457, 0.0
    %551 = vadd.xlane.f32.xlu0 %v550
    %v552 = vpop.xlane.xlu0 %551
    %v553 = vsel %vm459, %v458, 0.0
    %554 = vadd.xlane.f32.xlu0 %v553
    %v555 = vpop.xlane.xlu0 %554
    %v588 = vlaneseq
    %v589 = vand.u32 %v588, 127
    %v590 = vlaneseq
    %v591 = vshrl.u32 %v590, 7
    %v592 = vsub.s32 %v589, %v591
    %v593 = vrot.slane %v462, %v592
    %v594 = vlaneseq
    %v595 = vshrl.u32 %v594, 7
    %v596 = vsub.s32 %v589, %v595
    %v597 = vrot.slane %v465, %v596
    %v598 = vlaneseq
    %v599 = vshrl.u32 %v598, 7
    %v600 = vsub.s32 %v589, %v599
    %v601 = vrot.slane %v468, %v600
    %v602 = vlaneseq
    %v603 = vshrl.u32 %v602, 7
    %v604 = vsub.s32 %v589, %v603
    %v605 = vrot.slane %v471, %v604
    %v606 = vlaneseq
    %v607 = vshrl.u32 %v606, 7
    %v608 = vsub.s32 %v589, %v607
    %v609 = vrot.slane %v474, %v608
    %v610 = vlaneseq
    %v611 = vshrl.u32 %v610, 7
    %v612 = vsub.s32 %v589, %v611
    %v613 = vrot.slane %v477, %v612
    %v614 = vlaneseq
    %v615 = vshrl.u32 %v614, 7
    %v616 = vsub.s32 %v589, %v615
    %v617 = vrot.slane %v480, %v616
    %v618 = vlaneseq
    %v619 = vshrl.u32 %v618, 7
    %v620 = vsub.s32 %v589, %v619
    %v621 = vrot.slane %v483, %v620
    %v622 = vlaneseq
    %v623 = vshrl.u32 %v622, 7
    %v624 = vsub.s32 %v589, %v623
    %v625 = vrot.slane %v486, %v624
    %v626 = vlaneseq
    %v627 = vshrl.u32 %v626, 7
    %v628 = vsub.s32 %v589, %v627
    %v629 = vrot.slane %v489, %v628
    %v630 = vlaneseq
    %v631 = vshrl.u32 %v630, 7
    %v632 = vsub.s32 %v589, %v631
    %v633 = vrot.slane %v492, %v632
    %v634 = vlaneseq
    %v635 = vshrl.u32 %v634, 7
    %v636 = vsub.s32 %v589, %v635
    %v637 = vrot.slane %v495, %v636
    %v638 = vlaneseq
    %v639 = vshrl.u32 %v638, 7
    %v640 = vsub.s32 %v589, %v639
    %v641 = vrot.slane %v498, %v640
    %v642 = vlaneseq
    %v643 = vshrl.u32 %v642, 7
    %v644 = vsub.s32 %v589, %v643
    %v645 = vrot.slane %v501, %v644
    %v646 = vlaneseq
    %v647 = vshrl.u32 %v646, 7
    %v648 = vsub.s32 %v589, %v647
    %v649 = vrot.slane %v504, %v648
    %v650 = vlaneseq
    %v651 = vshrl.u32 %v650, 7
    %v652 = vsub.s32 %v589, %v651
    %v653 = vrot.slane %v507, %v652
    %v654 = vlaneseq
    %v655 = vshrl.u32 %v654, 7
    %v656 = vsub.s32 %v589, %v655
    %v657 = vrot.slane %v510, %v656
    %v658 = vlaneseq
    %v659 = vshrl.u32 %v658, 7
    %v660 = vsub.s32 %v589, %v659
    %v661 = vrot.slane %v513, %v660
    %v662 = vlaneseq
    %v663 = vshrl.u32 %v662, 7
    %v664 = vsub.s32 %v589, %v663
    %v665 = vrot.slane %v516, %v664
    %v666 = vlaneseq
    %v667 = vshrl.u32 %v666, 7
    %v668 = vsub.s32 %v589, %v667
    %v669 = vrot.slane %v519, %v668
    %v670 = vlaneseq
    %v671 = vshrl.u32 %v670, 7
    %v672 = vsub.s32 %v589, %v671
    %v673 = vrot.slane %v522, %v672
    %v674 = vlaneseq
    %v675 = vshrl.u32 %v674, 7
    %v676 = vsub.s32 %v589, %v675
    %v677 = vrot.slane %v525, %v676
    %v678 = vlaneseq
    %v679 = vshrl.u32 %v678, 7
    %v680 = vsub.s32 %v589, %v679
    %v681 = vrot.slane %v528, %v680
    %v682 = vlaneseq
    %v683 = vshrl.u32 %v682, 7
    %v684 = vsub.s32 %v589, %v683
    %v685 = vrot.slane %v531, %v684
    %v686 = vlaneseq
    %v687 = vshrl.u32 %v686, 7
    %v688 = vsub.s32 %v589, %v687
    %v689 = vrot.slane %v534, %v688
    %v690 = vlaneseq
    %v691 = vshrl.u32 %v690, 7
    %v692 = vsub.s32 %v589, %v691
    %v693 = vrot.slane %v537, %v692
    %v694 = vlaneseq
    %v695 = vshrl.u32 %v694, 7
    %v696 = vsub.s32 %v589, %v695
    %v697 = vrot.slane %v540, %v696
    %v698 = vlaneseq
    %v699 = vshrl.u32 %v698, 7
    %v700 = vsub.s32 %v589, %v699
    %v701 = vrot.slane %v543, %v700
    %v702 = vlaneseq
    %v703 = vshrl.u32 %v702, 7
    %v704 = vsub.s32 %v589, %v703
    %v705 = vrot.slane %v546, %v704
    %v706 = vlaneseq
    %v707 = vshrl.u32 %v706, 7
    %v708 = vsub.s32 %v589, %v707
    %v709 = vrot.slane %v549, %v708
    %v710 = vlaneseq
    %v711 = vshrl.u32 %v710, 7
    %v712 = vsub.s32 %v589, %v711
    %v713 = vrot.slane %v552, %v712
    %v714 = vlaneseq
    %v715 = vshrl.u32 %v714, 7
    %v716 = vsub.s32 %v589, %v715
    %v717 = vrot.slane %v555, %v716
    %vm718 = vcmask 1041409
    %v719 = vsel %vm718, %v597, %v593
    %vm720 = vcmask 1042434
    %v721 = vsel %vm720, %v601, %v719
    %vm722 = vcmask 1043459
    %v723 = vsel %vm722, %v605, %v721
    %vm724 = vcmask 1044484
    %v725 = vsel %vm724, %v609, %v723
    %vm726 = vcmask 1045509
    %v727 = vsel %vm726, %v613, %v725
    %vm728 = vcmask 1046534
    %v729 = vsel %vm728, %v617, %v727
    %vm730 = vcmask 1047559
    %v731 = vsel %vm730, %v621, %v729
    %v732 = vsel %vm718, %v629, %v625
    %v733 = vsel %vm720, %v633, %v732
    %v734 = vsel %vm722, %v637, %v733
    %v735 = vsel %vm724, %v641, %v734
    %v736 = vsel %vm726, %v645, %v735
    %v737 = vsel %vm728, %v649, %v736
    %v738 = vsel %vm730, %v653, %v737
    %v739 = vsel %vm718, %v661, %v657
    %v740 = vsel %vm720, %v665, %v739
    %v741 = vsel %vm722, %v669, %v740
    %v742 = vsel %vm724, %v673, %v741
    %v743 = vsel %vm726, %v677, %v742
    %v744 = vsel %vm728, %v681, %v743
    %v745 = vsel %vm730, %v685, %v744
    %v746 = vsel %vm718, %v693, %v689
    %v747 = vsel %vm720, %v697, %v746
    %v748 = vsel %vm722, %v701, %v747
    %v749 = vsel %vm724, %v705, %v748
    %v750 = vsel %vm726, %v709, %v749
    %v751 = vsel %vm728, %v713, %v750
    %v752 = vsel %vm730, %v717, %v751
    %vm757 = vcmask 64512
    %v758 = vsel %vm757, %v731, -inf
    %759 = vmax.xlane.f32.xlu0 %v758
    %v760 = vpop.xlane.xlu0 %759
    %v761 = vsel %vm757, %v738, -inf
    %762 = vmax.xlane.f32.xlu0 %v761
    %v763 = vpop.xlane.xlu0 %762
    %v764 = vsel %vm757, %v745, -inf
    %765 = vmax.xlane.f32.xlu0 %v764
    %v766 = vpop.xlane.xlu0 %765
    %v767 = vsel %vm757, %v752, -inf
    %768 = vmax.xlane.f32.xlu0 %v767
    %v769 = vpop.xlane.xlu0 %768
    %v774 = vlaneseq
    %v775 = vshrl.u32 %v774, 7
    %v776 = vsub.s32 0, %v775
    %v777 = vrot.slane %v760, %v776
    %v778 = vlaneseq
    %v779 = vshrl.u32 %v778, 7
    %v780 = vsub.s32 1, %v779
    %v781 = vrot.slane %v760, %v780
    %v782 = vlaneseq
    %v783 = vshrl.u32 %v782, 7
    %v784 = vsub.s32 2, %v783
    %v785 = vrot.slane %v760, %v784
    %v786 = vlaneseq
    %v787 = vshrl.u32 %v786, 7
    %v788 = vsub.s32 3, %v787
    %v789 = vrot.slane %v760, %v788
    %v790 = vlaneseq
    %v791 = vshrl.u32 %v790, 7
    %v792 = vsub.s32 4, %v791
    %v793 = vrot.slane %v760, %v792
    %v794 = vlaneseq
    %v795 = vshrl.u32 %v794, 7
    %v796 = vsub.s32 5, %v795
    %v797 = vrot.slane %v760, %v796
    %v798 = vlaneseq
    %v799 = vshrl.u32 %v798, 7
    %v800 = vsub.s32 6, %v799
    %v801 = vrot.slane %v760, %v800
    %v802 = vlaneseq
    %v803 = vshrl.u32 %v802, 7
    %v804 = vsub.s32 7, %v803
    %v805 = vrot.slane %v760, %v804
    %v806 = vlaneseq
    %v807 = vshrl.u32 %v806, 7
    %v808 = vsub.s32 0, %v807
    %v809 = vrot.slane %v763, %v808
    %v810 = vlaneseq
    %v811 = vshrl.u32 %v810, 7
    %v812 = vsub.s32 1, %v811
    %v813 = vrot.slane %v763, %v812
    %v814 = vlaneseq
    %v815 = vshrl.u32 %v814, 7
    %v816 = vsub.s32 2, %v815
    %v817 = vrot.slane %v763, %v816
    %v818 = vlaneseq
    %v819 = vshrl.u32 %v818, 7
    %v820 = vsub.s32 3, %v819
    %v821 = vrot.slane %v763, %v820
    %v822 = vlaneseq
    %v823 = vshrl.u32 %v822, 7
    %v824 = vsub.s32 4, %v823
    %v825 = vrot.slane %v763, %v824
    %v826 = vlaneseq
    %v827 = vshrl.u32 %v826, 7
    %v828 = vsub.s32 5, %v827
    %v829 = vrot.slane %v763, %v828
    %v830 = vlaneseq
    %v831 = vshrl.u32 %v830, 7
    %v832 = vsub.s32 6, %v831
    %v833 = vrot.slane %v763, %v832
    %v834 = vlaneseq
    %v835 = vshrl.u32 %v834, 7
    %v836 = vsub.s32 7, %v835
    %v837 = vrot.slane %v763, %v836
    %v838 = vlaneseq
    %v839 = vshrl.u32 %v838, 7
    %v840 = vsub.s32 0, %v839
    %v841 = vrot.slane %v766, %v840
    %v842 = vlaneseq
    %v843 = vshrl.u32 %v842, 7
    %v844 = vsub.s32 1, %v843
    %v845 = vrot.slane %v766, %v844
    %v846 = vlaneseq
    %v847 = vshrl.u32 %v846, 7
    %v848 = vsub.s32 2, %v847
    %v849 = vrot.slane %v766, %v848
    %v850 = vlaneseq
    %v851 = vshrl.u32 %v850, 7
    %v852 = vsub.s32 3, %v851
    %v853 = vrot.slane %v766, %v852
    %v854 = vlaneseq
    %v855 = vshrl.u32 %v854, 7
    %v856 = vsub.s32 4, %v855
    %v857 = vrot.slane %v766, %v856
    %v858 = vlaneseq
    %v859 = vshrl.u32 %v858, 7
    %v860 = vsub.s32 5, %v859
    %v861 = vrot.slane %v766, %v860
    %v862 = vlaneseq
    %v863 = vshrl.u32 %v862, 7
    %v864 = vsub.s32 6, %v863
    %v865 = vrot.slane %v766, %v864
    %v866 = vlaneseq
    %v867 = vshrl.u32 %v866, 7
    %v868 = vsub.s32 7, %v867
    %v869 = vrot.slane %v766, %v868
    %v870 = vlaneseq
    %v871 = vshrl.u32 %v870, 7
    %v872 = vsub.s32 0, %v871
    %v873 = vrot.slane %v769, %v872
    %v874 = vlaneseq
    %v875 = vshrl.u32 %v874, 7
    %v876 = vsub.s32 1, %v875
    %v877 = vrot.slane %v769, %v876
    %v878 = vlaneseq
    %v879 = vshrl.u32 %v878, 7
    %v880 = vsub.s32 2, %v879
    %v881 = vrot.slane %v769, %v880
    %v882 = vlaneseq
    %v883 = vshrl.u32 %v882, 7
    %v884 = vsub.s32 3, %v883
    %v885 = vrot.slane %v769, %v884
    %v886 = vlaneseq
    %v887 = vshrl.u32 %v886, 7
    %v888 = vsub.s32 4, %v887
    %v889 = vrot.slane %v769, %v888
    %v890 = vlaneseq
    %v891 = vshrl.u32 %v890, 7
    %v892 = vsub.s32 5, %v891
    %v893 = vrot.slane %v769, %v892
    %v894 = vlaneseq
    %v895 = vshrl.u32 %v894, 7
    %v896 = vsub.s32 6, %v895
    %v897 = vrot.slane %v769, %v896
    %v898 = vlaneseq
    %v899 = vshrl.u32 %v898, 7
    %v900 = vsub.s32 7, %v899
    %v901 = vrot.slane %v769, %v900
    %v934 = vsub.f32 %v462, %v777
    %v935 = vsub.f32 %v465, %v781
    %v936 = vsub.f32 %v468, %v785
    %v937 = vsub.f32 %v471, %v789
    %v938 = vsub.f32 %v474, %v793
    %v939 = vsub.f32 %v477, %v797
    %v940 = vsub.f32 %v480, %v801
    %v941 = vsub.f32 %v483, %v805
    %v942 = vsub.f32 %v486, %v809
    %v943 = vsub.f32 %v489, %v813
    %v944 = vsub.f32 %v492, %v817
    %v945 = vsub.f32 %v495, %v821
    %v946 = vsub.f32 %v498, %v825
    %v947 = vsub.f32 %v501, %v829
    %v948 = vsub.f32 %v504, %v833
    %v949 = vsub.f32 %v507, %v837
    %v950 = vsub.f32 %v510, %v841
    %v951 = vsub.f32 %v513, %v845
    %v952 = vsub.f32 %v516, %v849
    %v953 = vsub.f32 %v519, %v853
    %v954 = vsub.f32 %v522, %v857
    %v955 = vsub.f32 %v525, %v861
    %v956 = vsub.f32 %v528, %v865
    %v957 = vsub.f32 %v531, %v869
    %v958 = vsub.f32 %v534, %v873
    %v959 = vsub.f32 %v537, %v877
    %v960 = vsub.f32 %v540, %v881
    %v961 = vsub.f32 %v543, %v885
    %v962 = vsub.f32 %v546, %v889
    %v963 = vsub.f32 %v549, %v893
    %v964 = vsub.f32 %v552, %v897
    %v965 = vsub.f32 %v555, %v901
    %v966 = vmul.f32 %v934, 1.442695
    %v967 = vpow.pop %v966
    %v968 = vmul.f32 %v935, 1.442695
    %v969 = vpow.pop %v968
    %v970 = vmul.f32 %v936, 1.442695
    %v971 = vpow.pop %v970
    %v972 = vmul.f32 %v937, 1.442695
    %v973 = vpow.pop %v972
    %v974 = vmul.f32 %v938, 1.442695
    %v975 = vpow.pop %v974
    %v976 = vmul.f32 %v939, 1.442695
    %v977 = vpow.pop %v976
    %v978 = vmul.f32 %v940, 1.442695
    %v979 = vpow.pop %v978
    %v980 = vmul.f32 %v941, 1.442695
    %v981 = vpow.pop %v980
    %v982 = vmul.f32 %v942, 1.442695
    %v983 = vpow.pop %v982
    %v984 = vmul.f32 %v943, 1.442695
    %v985 = vpow.pop %v984
    %v986 = vmul.f32 %v944, 1.442695
    %v987 = vpow.pop %v986
    %v988 = vmul.f32 %v945, 1.442695
    %v989 = vpow.pop %v988
    %v990 = vmul.f32 %v946, 1.442695
    %v991 = vpow.pop %v990
    %v992 = vmul.f32 %v947, 1.442695
    %v993 = vpow.pop %v992
    %v994 = vmul.f32 %v948, 1.442695
    %v995 = vpow.pop %v994
    %v996 = vmul.f32 %v949, 1.442695
    %v997 = vpow.pop %v996
    %v998 = vmul.f32 %v950, 1.442695
    %v999 = vpow.pop %v998
    %v1000 = vmul.f32 %v951, 1.442695
    %v1001 = vpow.pop %v1000
    %v1002 = vmul.f32 %v952, 1.442695
    %v1003 = vpow.pop %v1002
    %v1004 = vmul.f32 %v953, 1.442695
    %v1005 = vpow.pop %v1004
    %v1006 = vmul.f32 %v954, 1.442695
    %v1007 = vpow.pop %v1006
    %v1008 = vmul.f32 %v955, 1.442695
    %v1009 = vpow.pop %v1008
    %v1010 = vmul.f32 %v956, 1.442695
    %v1011 = vpow.pop %v1010
    %v1012 = vmul.f32 %v957, 1.442695
    %v1013 = vpow.pop %v1012
    %v1014 = vmul.f32 %v958, 1.442695
    %v1015 = vpow.pop %v1014
    %v1016 = vmul.f32 %v959, 1.442695
    %v1017 = vpow.pop %v1016
    %v1018 = vmul.f32 %v960, 1.442695
    %v1019 = vpow.pop %v1018
    %v1020 = vmul.f32 %v961, 1.442695
    %v1021 = vpow.pop %v1020
    %v1022 = vmul.f32 %v962, 1.442695
    %v1023 = vpow.pop %v1022
    %v1024 = vmul.f32 %v963, 1.442695
    %v1025 = vpow.pop %v1024
    %v1026 = vmul.f32 %v964, 1.442695
    %v1027 = vpow.pop %v1026
    %v1028 = vmul.f32 %v965, 1.442695
    %v1029 = vpow.pop %v1028
    %1062 = vset.pattern.permute.xlu0 0
    %1063 = vperm.xlu0 %1062, %v967
    %v1064 = vpop.permute.xlu0 %1063
    %1065 = vset.pattern.permute.xlu0 0
    %1066 = vperm.xlu0 %1065, %v969
    %v1067 = vpop.permute.xlu0 %1066
    %1068 = vset.pattern.permute.xlu0 0
    %1069 = vperm.xlu0 %1068, %v971
    %v1070 = vpop.permute.xlu0 %1069
    %1071 = vset.pattern.permute.xlu0 0
    %1072 = vperm.xlu0 %1071, %v973
    %v1073 = vpop.permute.xlu0 %1072
    %1074 = vset.pattern.permute.xlu0 0
    %1075 = vperm.xlu0 %1074, %v975
    %v1076 = vpop.permute.xlu0 %1075
    %1077 = vset.pattern.permute.xlu0 0
    %1078 = vperm.xlu0 %1077, %v977
    %v1079 = vpop.permute.xlu0 %1078
    %1080 = vset.pattern.permute.xlu0 0
    %1081 = vperm.xlu0 %1080, %v979
    %v1082 = vpop.permute.xlu0 %1081
    %1083 = vset.pattern.permute.xlu0 0
    %1084 = vperm.xlu0 %1083, %v981
    %v1085 = vpop.permute.xlu0 %1084
    %1086 = vset.pattern.permute.xlu0 0
    %1087 = vperm.xlu0 %1086, %v983
    %v1088 = vpop.permute.xlu0 %1087
    %1089 = vset.pattern.permute.xlu0 0
    %1090 = vperm.xlu0 %1089, %v985
    %v1091 = vpop.permute.xlu0 %1090
    %1092 = vset.pattern.permute.xlu0 0
    %1093 = vperm.xlu0 %1092, %v987
    %v1094 = vpop.permute.xlu0 %1093
    %1095 = vset.pattern.permute.xlu0 0
    %1096 = vperm.xlu0 %1095, %v989
    %v1097 = vpop.permute.xlu0 %1096
    %1098 = vset.pattern.permute.xlu0 0
    %1099 = vperm.xlu0 %1098, %v991
    %v1100 = vpop.permute.xlu0 %1099
    %1101 = vset.pattern.permute.xlu0 0
    %1102 = vperm.xlu0 %1101, %v993
    %v1103 = vpop.permute.xlu0 %1102
    %1104 = vset.pattern.permute.xlu0 0
    %1105 = vperm.xlu0 %1104, %v995
    %v1106 = vpop.permute.xlu0 %1105
    %1107 = vset.pattern.permute.xlu0 0
    %1108 = vperm.xlu0 %1107, %v997
    %v1109 = vpop.permute.xlu0 %1108
    %1110 = vset.pattern.permute.xlu0 0
    %1111 = vperm.xlu0 %1110, %v999
    %v1112 = vpop.permute.xlu0 %1111
    %1113 = vset.pattern.permute.xlu0 0
    %1114 = vperm.xlu0 %1113, %v1001
    %v1115 = vpop.permute.xlu0 %1114
    %1116 = vset.pattern.permute.xlu0 0
    %1117 = vperm.xlu0 %1116, %v1003
    %v1118 = vpop.permute.xlu0 %1117
    %1119 = vset.pattern.permute.xlu0 0
    %1120 = vperm.xlu0 %1119, %v1005
    %v1121 = vpop.permute.xlu0 %1120
    %1122 = vset.pattern.permute.xlu0 0
    %1123 = vperm.xlu0 %1122, %v1007
    %v1124 = vpop.permute.xlu0 %1123
    %1125 = vset.pattern.permute.xlu0 0
    %1126 = vperm.xlu0 %1125, %v1009
    %v1127 = vpop.permute.xlu0 %1126
    %1128 = vset.pattern.permute.xlu0 0
    %1129 = vperm.xlu0 %1128, %v1011
    %v1130 = vpop.permute.xlu0 %1129
    %1131 = vset.pattern.permute.xlu0 0
    %1132 = vperm.xlu0 %1131, %v1013
    %v1133 = vpop.permute.xlu0 %1132
    %1134 = vset.pattern.permute.xlu0 0
    %1135 = vperm.xlu0 %1134, %v1015
    %v1136 = vpop.permute.xlu0 %1135
    %1137 = vset.pattern.permute.xlu0 0
    %1138 = vperm.xlu0 %1137, %v1017
    %v1139 = vpop.permute.xlu0 %1138
    %1140 = vset.pattern.permute.xlu0 0
    %1141 = vperm.xlu0 %1140, %v1019
    %v1142 = vpop.permute.xlu0 %1141
    %1143 = vset.pattern.permute.xlu0 0
    %1144 = vperm.xlu0 %1143, %v1021
    %v1145 = vpop.permute.xlu0 %1144
    %1146 = vset.pattern.permute.xlu0 0
    %1147 = vperm.xlu0 %1146, %v1023
    %v1148 = vpop.permute.xlu0 %1147
    %1149 = vset.pattern.permute.xlu0 0
    %1150 = vperm.xlu0 %1149, %v1025
    %v1151 = vpop.permute.xlu0 %1150
    %1152 = vset.pattern.permute.xlu0 0
    %1153 = vperm.xlu0 %1152, %v1027
    %v1154 = vpop.permute.xlu0 %1153
    %1155 = vset.pattern.permute.xlu0 0
    %1156 = vperm.xlu0 %1155, %v1029
    %v1157 = vpop.permute.xlu0 %1156
    %v1158 = vlaneseq
    %v1159 = vshrl.u32 %v1158, 7
    %v1160 = vsub.s32 %v589, %v1159
    %v1161 = vrot.slane %v1064, %v1160
    %v1162 = vlaneseq
    %v1163 = vshrl.u32 %v1162, 7
    %v1164 = vsub.s32 %v589, %v1163
    %v1165 = vrot.slane %v1067, %v1164
    %v1166 = vlaneseq
    %v1167 = vshrl.u32 %v1166, 7
    %v1168 = vsub.s32 %v589, %v1167
    %v1169 = vrot.slane %v1070, %v1168
    %v1170 = vlaneseq
    %v1171 = vshrl.u32 %v1170, 7
    %v1172 = vsub.s32 %v589, %v1171
    %v1173 = vrot.slane %v1073, %v1172
    %v1174 = vlaneseq
    %v1175 = vshrl.u32 %v1174, 7
    %v1176 = vsub.s32 %v589, %v1175
    %v1177 = vrot.slane %v1076, %v1176
    %v1178 = vlaneseq
    %v1179 = vshrl.u32 %v1178, 7
    %v1180 = vsub.s32 %v589, %v1179
    %v1181 = vrot.slane %v1079, %v1180
    %v1182 = vlaneseq
    %v1183 = vshrl.u32 %v1182, 7
    %v1184 = vsub.s32 %v589, %v1183
    %v1185 = vrot.slane %v1082, %v1184
    %v1186 = vlaneseq
    %v1187 = vshrl.u32 %v1186, 7
    %v1188 = vsub.s32 %v589, %v1187
    %v1189 = vrot.slane %v1085, %v1188
    %v1190 = vlaneseq
    %v1191 = vshrl.u32 %v1190, 7
    %v1192 = vsub.s32 %v589, %v1191
    %v1193 = vrot.slane %v1088, %v1192
    %v1194 = vlaneseq
    %v1195 = vshrl.u32 %v1194, 7
    %v1196 = vsub.s32 %v589, %v1195
    %v1197 = vrot.slane %v1091, %v1196
    %v1198 = vlaneseq
    %v1199 = vshrl.u32 %v1198, 7
    %v1200 = vsub.s32 %v589, %v1199
    %v1201 = vrot.slane %v1094, %v1200
    %v1202 = vlaneseq
    %v1203 = vshrl.u32 %v1202, 7
    %v1204 = vsub.s32 %v589, %v1203
    %v1205 = vrot.slane %v1097, %v1204
    %v1206 = vlaneseq
    %v1207 = vshrl.u32 %v1206, 7
    %v1208 = vsub.s32 %v589, %v1207
    %v1209 = vrot.slane %v1100, %v1208
    %v1210 = vlaneseq
    %v1211 = vshrl.u32 %v1210, 7
    %v1212 = vsub.s32 %v589, %v1211
    %v1213 = vrot.slane %v1103, %v1212
    %v1214 = vlaneseq
    %v1215 = vshrl.u32 %v1214, 7
    %v1216 = vsub.s32 %v589, %v1215
    %v1217 = vrot.slane %v1106, %v1216
    %v1218 = vlaneseq
    %v1219 = vshrl.u32 %v1218, 7
    %v1220 = vsub.s32 %v589, %v1219
    %v1221 = vrot.slane %v1109, %v1220
    %v1222 = vlaneseq
    %v1223 = vshrl.u32 %v1222, 7
    %v1224 = vsub.s32 %v589, %v1223
    %v1225 = vrot.slane %v1112, %v1224
    %v1226 = vlaneseq
    %v1227 = vshrl.u32 %v1226, 7
    %v1228 = vsub.s32 %v589, %v1227
    %v1229 = vrot.slane %v1115, %v1228
    %v1230 = vlaneseq
    %v1231 = vshrl.u32 %v1230, 7
    %v1232 = vsub.s32 %v589, %v1231
    %v1233 = vrot.slane %v1118, %v1232
    %v1234 = vlaneseq
    %v1235 = vshrl.u32 %v1234, 7
    %v1236 = vsub.s32 %v589, %v1235
    %v1237 = vrot.slane %v1121, %v1236
    %v1238 = vlaneseq
    %v1239 = vshrl.u32 %v1238, 7
    %v1240 = vsub.s32 %v589, %v1239
    %v1241 = vrot.slane %v1124, %v1240
    %v1242 = vlaneseq
    %v1243 = vshrl.u32 %v1242, 7
    %v1244 = vsub.s32 %v589, %v1243
    %v1245 = vrot.slane %v1127, %v1244
    %v1246 = vlaneseq
    %v1247 = vshrl.u32 %v1246, 7
    %v1248 = vsub.s32 %v589, %v1247
    %v1249 = vrot.slane %v1130, %v1248
    %v1250 = vlaneseq
    %v1251 = vshrl.u32 %v1250, 7
    %v1252 = vsub.s32 %v589, %v1251
    %v1253 = vrot.slane %v1133, %v1252
    %v1254 = vlaneseq
    %v1255 = vshrl.u32 %v1254, 7
    %v1256 = vsub.s32 %v589, %v1255
    %v1257 = vrot.slane %v1136, %v1256
    %v1258 = vlaneseq
    %v1259 = vshrl.u32 %v1258, 7
    %v1260 = vsub.s32 %v589, %v1259
    %v1261 = vrot.slane %v1139, %v1260
    %v1262 = vlaneseq
    %v1263 = vshrl.u32 %v1262, 7
    %v1264 = vsub.s32 %v589, %v1263
    %v1265 = vrot.slane %v1142, %v1264
    %v1266 = vlaneseq
    %v1267 = vshrl.u32 %v1266, 7
    %v1268 = vsub.s32 %v589, %v1267
    %v1269 = vrot.slane %v1145, %v1268
    %v1270 = vlaneseq
    %v1271 = vshrl.u32 %v1270, 7
    %v1272 = vsub.s32 %v589, %v1271
    %v1273 = vrot.slane %v1148, %v1272
    %v1274 = vlaneseq
    %v1275 = vshrl.u32 %v1274, 7
    %v1276 = vsub.s32 %v589, %v1275
    %v1277 = vrot.slane %v1151, %v1276
    %v1278 = vlaneseq
    %v1279 = vshrl.u32 %v1278, 7
    %v1280 = vsub.s32 %v589, %v1279
    %v1281 = vrot.slane %v1154, %v1280
    %v1282 = vlaneseq
    %v1283 = vshrl.u32 %v1282, 7
    %v1284 = vsub.s32 %v589, %v1283
    %v1285 = vrot.slane %v1157, %v1284
    %v1286 = vsel %vm718, %v1165, %v1161
    %v1287 = vsel %vm720, %v1169, %v1286
    %v1288 = vsel %vm722, %v1173, %v1287
    %v1289 = vsel %vm724, %v1177, %v1288
    %v1290 = vsel %vm726, %v1181, %v1289
    %v1291 = vsel %vm728, %v1185, %v1290
    %v1292 = vsel %vm730, %v1189, %v1291
    %v1293 = vsel %vm718, %v1197, %v1193
    %v1294 = vsel %vm720, %v1201, %v1293
    %v1295 = vsel %vm722, %v1205, %v1294
    %v1296 = vsel %vm724, %v1209, %v1295
    %v1297 = vsel %vm726, %v1213, %v1296
    %v1298 = vsel %vm728, %v1217, %v1297
    %v1299 = vsel %vm730, %v1221, %v1298
    %v1300 = vsel %vm718, %v1229, %v1225
    %v1301 = vsel %vm720, %v1233, %v1300
    %v1302 = vsel %vm722, %v1237, %v1301
    %v1303 = vsel %vm724, %v1241, %v1302
    %v1304 = vsel %vm726, %v1245, %v1303
    %v1305 = vsel %vm728, %v1249, %v1304
    %v1306 = vsel %vm730, %v1253, %v1305
    %v1307 = vsel %vm718, %v1261, %v1257
    %v1308 = vsel %vm720, %v1265, %v1307
    %v1309 = vsel %vm722, %v1269, %v1308
    %v1310 = vsel %vm724, %v1273, %v1309
    %v1311 = vsel %vm726, %v1277, %v1310
    %v1312 = vsel %vm728, %v1281, %v1311
    %v1313 = vsel %vm730, %v1285, %v1312
    %v1318 = vsel %vm757, %v1292, 0.0
    %1319 = vadd.xlane.f32.xlu0 %v1318
    %v1320 = vpop.xlane.xlu0 %1319
    %v1321 = vsel %vm757, %v1299, 0.0
    %1322 = vadd.xlane.f32.xlu0 %v1321
    %v1323 = vpop.xlane.xlu0 %1322
    %v1324 = vsel %vm757, %v1306, 0.0
    %1325 = vadd.xlane.f32.xlu0 %v1324
    %v1326 = vpop.xlane.xlu0 %1325
    %v1327 = vsel %vm757, %v1313, 0.0
    %1328 = vadd.xlane.f32.xlu0 %v1327
    %v1329 = vpop.xlane.xlu0 %1328
    %v1334 = vlaneseq
    %v1335 = vshrl.u32 %v1334, 7
    %v1336 = vsub.s32 0, %v1335
    %v1337 = vrot.slane %v1320, %v1336
    %v1338 = vlaneseq
    %v1339 = vshrl.u32 %v1338, 7
    %v1340 = vsub.s32 1, %v1339
    %v1341 = vrot.slane %v1320, %v1340
    %v1342 = vlaneseq
    %v1343 = vshrl.u32 %v1342, 7
    %v1344 = vsub.s32 2, %v1343
    %v1345 = vrot.slane %v1320, %v1344
    %v1346 = vlaneseq
    %v1347 = vshrl.u32 %v1346, 7
    %v1348 = vsub.s32 3, %v1347
    %v1349 = vrot.slane %v1320, %v1348
    %v1350 = vlaneseq
    %v1351 = vshrl.u32 %v1350, 7
    %v1352 = vsub.s32 4, %v1351
    %v1353 = vrot.slane %v1320, %v1352
    %v1354 = vlaneseq
    %v1355 = vshrl.u32 %v1354, 7
    %v1356 = vsub.s32 5, %v1355
    %v1357 = vrot.slane %v1320, %v1356
    %v1358 = vlaneseq
    %v1359 = vshrl.u32 %v1358, 7
    %v1360 = vsub.s32 6, %v1359
    %v1361 = vrot.slane %v1320, %v1360
    %v1362 = vlaneseq
    %v1363 = vshrl.u32 %v1362, 7
    %v1364 = vsub.s32 7, %v1363
    %v1365 = vrot.slane %v1320, %v1364
    %v1366 = vlaneseq
    %v1367 = vshrl.u32 %v1366, 7
    %v1368 = vsub.s32 0, %v1367
    %v1369 = vrot.slane %v1323, %v1368
    %v1370 = vlaneseq
    %v1371 = vshrl.u32 %v1370, 7
    %v1372 = vsub.s32 1, %v1371
    %v1373 = vrot.slane %v1323, %v1372
    %v1374 = vlaneseq
    %v1375 = vshrl.u32 %v1374, 7
    %v1376 = vsub.s32 2, %v1375
    %v1377 = vrot.slane %v1323, %v1376
    %v1378 = vlaneseq
    %v1379 = vshrl.u32 %v1378, 7
    %v1380 = vsub.s32 3, %v1379
    %v1381 = vrot.slane %v1323, %v1380
    %v1382 = vlaneseq
    %v1383 = vshrl.u32 %v1382, 7
    %v1384 = vsub.s32 4, %v1383
    %v1385 = vrot.slane %v1323, %v1384
    %v1386 = vlaneseq
    %v1387 = vshrl.u32 %v1386, 7
    %v1388 = vsub.s32 5, %v1387
    %v1389 = vrot.slane %v1323, %v1388
    %v1390 = vlaneseq
    %v1391 = vshrl.u32 %v1390, 7
    %v1392 = vsub.s32 6, %v1391
    %v1393 = vrot.slane %v1323, %v1392
    %v1394 = vlaneseq
    %v1395 = vshrl.u32 %v1394, 7
    %v1396 = vsub.s32 7, %v1395
    %v1397 = vrot.slane %v1323, %v1396
    %v1398 = vlaneseq
    %v1399 = vshrl.u32 %v1398, 7
    %v1400 = vsub.s32 0, %v1399
    %v1401 = vrot.slane %v1326, %v1400
    %v1402 = vlaneseq
    %v1403 = vshrl.u32 %v1402, 7
    %v1404 = vsub.s32 1, %v1403
    %v1405 = vrot.slane %v1326, %v1404
    %v1406 = vlaneseq
    %v1407 = vshrl.u32 %v1406, 7
    %v1408 = vsub.s32 2, %v1407
    %v1409 = vrot.slane %v1326, %v1408
    %v1410 = vlaneseq
    %v1411 = vshrl.u32 %v1410, 7
    %v1412 = vsub.s32 3, %v1411
    %v1413 = vrot.slane %v1326, %v1412
    %v1414 = vlaneseq
    %v1415 = vshrl.u32 %v1414, 7
    %v1416 = vsub.s32 4, %v1415
    %v1417 = vrot.slane %v1326, %v1416
    %v1418 = vlaneseq
    %v1419 = vshrl.u32 %v1418, 7
    %v1420 = vsub.s32 5, %v1419
    %v1421 = vrot.slane %v1326, %v1420
    %v1422 = vlaneseq
    %v1423 = vshrl.u32 %v1422, 7
    %v1424 = vsub.s32 6, %v1423
    %v1425 = vrot.slane %v1326, %v1424
    %v1426 = vlaneseq
    %v1427 = vshrl.u32 %v1426, 7
    %v1428 = vsub.s32 7, %v1427
    %v1429 = vrot.slane %v1326, %v1428
    %v1430 = vlaneseq
    %v1431 = vshrl.u32 %v1430, 7
    %v1432 = vsub.s32 0, %v1431
    %v1433 = vrot.slane %v1329, %v1432
    %v1434 = vlaneseq
    %v1435 = vshrl.u32 %v1434, 7
    %v1436 = vsub.s32 1, %v1435
    %v1437 = vrot.slane %v1329, %v1436
    %v1438 = vlaneseq
    %v1439 = vshrl.u32 %v1438, 7
    %v1440 = vsub.s32 2, %v1439
    %v1441 = vrot.slane %v1329, %v1440
    %v1442 = vlaneseq
    %v1443 = vshrl.u32 %v1442, 7
    %v1444 = vsub.s32 3, %v1443
    %v1445 = vrot.slane %v1329, %v1444
    %v1446 = vlaneseq
    %v1447 = vshrl.u32 %v1446, 7
    %v1448 = vsub.s32 4, %v1447
    %v1449 = vrot.slane %v1329, %v1448
    %v1450 = vlaneseq
    %v1451 = vshrl.u32 %v1450, 7
    %v1452 = vsub.s32 5, %v1451
    %v1453 = vrot.slane %v1329, %v1452
    %v1454 = vlaneseq
    %v1455 = vshrl.u32 %v1454, 7
    %v1456 = vsub.s32 6, %v1455
    %v1457 = vrot.slane %v1329, %v1456
    %v1458 = vlaneseq
    %v1459 = vshrl.u32 %v1458, 7
    %v1460 = vsub.s32 7, %v1459
    %v1461 = vrot.slane %v1329, %v1460
    %v1494 = vrcp.pop %v1337
    %v1495 = vmul.f32 %v967, %v1494
    %v1496 = vrcp.pop %v1341
    %v1497 = vmul.f32 %v969, %v1496
    %v1498 = vrcp.pop %v1345
    %v1499 = vmul.f32 %v971, %v1498
    %v1500 = vrcp.pop %v1349
    %v1501 = vmul.f32 %v973, %v1500
    %v1502 = vrcp.pop %v1353
    %v1503 = vmul.f32 %v975, %v1502
    %v1504 = vrcp.pop %v1357
    %v1505 = vmul.f32 %v977, %v1504
    %v1506 = vrcp.pop %v1361
    %v1507 = vmul.f32 %v979, %v1506
    %v1508 = vrcp.pop %v1365
    %v1509 = vmul.f32 %v981, %v1508
    %v1510 = vrcp.pop %v1369
    %v1511 = vmul.f32 %v983, %v1510
    %v1512 = vrcp.pop %v1373
    %v1513 = vmul.f32 %v985, %v1512
    %v1514 = vrcp.pop %v1377
    %v1515 = vmul.f32 %v987, %v1514
    %v1516 = vrcp.pop %v1381
    %v1517 = vmul.f32 %v989, %v1516
    %v1518 = vrcp.pop %v1385
    %v1519 = vmul.f32 %v991, %v1518
    %v1520 = vrcp.pop %v1389
    %v1521 = vmul.f32 %v993, %v1520
    %v1522 = vrcp.pop %v1393
    %v1523 = vmul.f32 %v995, %v1522
    %v1524 = vrcp.pop %v1397
    %v1525 = vmul.f32 %v997, %v1524
    %v1526 = vrcp.pop %v1401
    %v1527 = vmul.f32 %v999, %v1526
    %v1528 = vrcp.pop %v1405
    %v1529 = vmul.f32 %v1001, %v1528
    %v1530 = vrcp.pop %v1409
    %v1531 = vmul.f32 %v1003, %v1530
    %v1532 = vrcp.pop %v1413
    %v1533 = vmul.f32 %v1005, %v1532
    %v1534 = vrcp.pop %v1417
    %v1535 = vmul.f32 %v1007, %v1534
    %v1536 = vrcp.pop %v1421
    %v1537 = vmul.f32 %v1009, %v1536
    %v1538 = vrcp.pop %v1425
    %v1539 = vmul.f32 %v1011, %v1538
    %v1540 = vrcp.pop %v1429
    %v1541 = vmul.f32 %v1013, %v1540
    %v1542 = vrcp.pop %v1433
    %v1543 = vmul.f32 %v1015, %v1542
    %v1544 = vrcp.pop %v1437
    %v1545 = vmul.f32 %v1017, %v1544
    %v1546 = vrcp.pop %v1441
    %v1547 = vmul.f32 %v1019, %v1546
    %v1548 = vrcp.pop %v1445
    %v1549 = vmul.f32 %v1021, %v1548
    %v1550 = vrcp.pop %v1449
    %v1551 = vmul.f32 %v1023, %v1550
    %v1552 = vrcp.pop %v1453
    %v1553 = vmul.f32 %v1025, %v1552
    %v1554 = vrcp.pop %v1457
    %v1555 = vmul.f32 %v1027, %v1554
    %v1556 = vrcp.pop %v1461
    %v1557 = vmul.f32 %v1029, %v1556
    %1559 = vset.pattern.permute.xlu0 0
    %1560 = vperm.xlu0 %1559, %v1495
    %v1561 = vpop.permute.xlu0 %1560
    %1564 = vset.pattern.permute.xlu0 0
    %1565 = vperm.xlu0 %1564, %v1497
    %v1566 = vpop.permute.xlu0 %1565
    %1569 = vset.pattern.permute.xlu0 0
    %1570 = vperm.xlu0 %1569, %v1499
    %v1571 = vpop.permute.xlu0 %1570
    %1574 = vset.pattern.permute.xlu0 0
    %1575 = vperm.xlu0 %1574, %v1501
    %v1576 = vpop.permute.xlu0 %1575
    %1579 = vset.pattern.permute.xlu0 0
    %1580 = vperm.xlu0 %1579, %v1503
    %v1581 = vpop.permute.xlu0 %1580
    %1584 = vset.pattern.permute.xlu0 0
    %1585 = vperm.xlu0 %1584, %v1505
    %v1586 = vpop.permute.xlu0 %1585
    %1589 = vset.pattern.permute.xlu0 0
    %1590 = vperm.xlu0 %1589, %v1507
    %v1591 = vpop.permute.xlu0 %1590
    %1594 = vset.pattern.permute.xlu0 0
    %1595 = vperm.xlu0 %1594, %v1509
    %v1596 = vpop.permute.xlu0 %1595
    %1599 = vset.pattern.permute.xlu0 0
    %1600 = vperm.xlu0 %1599, %v1511
    %v1601 = vpop.permute.xlu0 %1600
    %1604 = vset.pattern.permute.xlu0 0
    %1605 = vperm.xlu0 %1604, %v1513
    %v1606 = vpop.permute.xlu0 %1605
    %1609 = vset.pattern.permute.xlu0 0
    %1610 = vperm.xlu0 %1609, %v1515
    %v1611 = vpop.permute.xlu0 %1610
    %1614 = vset.pattern.permute.xlu0 0
    %1615 = vperm.xlu0 %1614, %v1517
    %v1616 = vpop.permute.xlu0 %1615
    %1619 = vset.pattern.permute.xlu0 0
    %1620 = vperm.xlu0 %1619, %v1519
    %v1621 = vpop.permute.xlu0 %1620
    %1624 = vset.pattern.permute.xlu0 0
    %1625 = vperm.xlu0 %1624, %v1521
    %v1626 = vpop.permute.xlu0 %1625
    %1629 = vset.pattern.permute.xlu0 0
    %1630 = vperm.xlu0 %1629, %v1523
    %v1631 = vpop.permute.xlu0 %1630
    %1634 = vset.pattern.permute.xlu0 0
    %1635 = vperm.xlu0 %1634, %v1525
    %v1636 = vpop.permute.xlu0 %1635
    %1639 = vset.pattern.permute.xlu0 0
    %1640 = vperm.xlu0 %1639, %v1527
    %v1641 = vpop.permute.xlu0 %1640
    %1644 = vset.pattern.permute.xlu0 0
    %1645 = vperm.xlu0 %1644, %v1529
    %v1646 = vpop.permute.xlu0 %1645
    %1649 = vset.pattern.permute.xlu0 0
    %1650 = vperm.xlu0 %1649, %v1531
    %v1651 = vpop.permute.xlu0 %1650
    %1654 = vset.pattern.permute.xlu0 0
    %1655 = vperm.xlu0 %1654, %v1533
    %v1656 = vpop.permute.xlu0 %1655
    %1659 = vset.pattern.permute.xlu0 0
    %1660 = vperm.xlu0 %1659, %v1535
    %v1661 = vpop.permute.xlu0 %1660
    %1664 = vset.pattern.permute.xlu0 0
    %1665 = vperm.xlu0 %1664, %v1537
    %v1666 = vpop.permute.xlu0 %1665
    %1669 = vset.pattern.permute.xlu0 0
    %1670 = vperm.xlu0 %1669, %v1539
    %v1671 = vpop.permute.xlu0 %1670
    %1674 = vset.pattern.permute.xlu0 0
    %1675 = vperm.xlu0 %1674, %v1541
    %v1676 = vpop.permute.xlu0 %1675
    %1679 = vset.pattern.permute.xlu0 0
    %1680 = vperm.xlu0 %1679, %v1543
    %v1681 = vpop.permute.xlu0 %1680
    %1684 = vset.pattern.permute.xlu0 0
    %1685 = vperm.xlu0 %1684, %v1545
    %v1686 = vpop.permute.xlu0 %1685
    %1689 = vset.pattern.permute.xlu0 0
    %1690 = vperm.xlu0 %1689, %v1547
    %v1691 = vpop.permute.xlu0 %1690
    %1694 = vset.pattern.permute.xlu0 0
    %1695 = vperm.xlu0 %1694, %v1549
    %v1696 = vpop.permute.xlu0 %1695
    %1699 = vset.pattern.permute.xlu0 0
    %1700 = vperm.xlu0 %1699, %v1551
    %v1701 = vpop.permute.xlu0 %1700
    %1704 = vset.pattern.permute.xlu0 0
    %1705 = vperm.xlu0 %1704, %v1553
    %v1706 = vpop.permute.xlu0 %1705
    %1709 = vset.pattern.permute.xlu0 0
    %1710 = vperm.xlu0 %1709, %v1555
    %v1711 = vpop.permute.xlu0 %1710
    %1714 = vset.pattern.permute.xlu0 0
    %1715 = vperm.xlu0 %1714, %v1557
    %v1716 = vpop.permute.xlu0 %1715
    %v1718 = vmul.f32 %v1561, %v107
    %v1719 = vmul.f32 %v1566, %v108
    %v1720 = vmul.f32 %v1571, %v109
    %v1721 = vmul.f32 %v1576, %v110
    %v1722 = vmul.f32 %v1581, %v111
    %v1723 = vmul.f32 %v1586, %v112
    %v1724 = vmul.f32 %v1591, %v113
    %v1725 = vmul.f32 %v1596, %v114
    %v1726 = vmul.f32 %v1601, %v115
    %v1727 = vmul.f32 %v1606, %v116
    %v1728 = vmul.f32 %v1611, %v117
    %v1729 = vmul.f32 %v1616, %v118
    %v1730 = vmul.f32 %v1621, %v119
    %v1731 = vmul.f32 %v1626, %v120
    %v1732 = vmul.f32 %v1631, %v121
    %v1733 = vmul.f32 %v1636, %v122
    %v1734 = vmul.f32 %v1641, %v123
    %v1735 = vmul.f32 %v1646, %v124
    %v1736 = vmul.f32 %v1651, %v125
    %v1737 = vmul.f32 %v1656, %v126
    %v1738 = vmul.f32 %v1661, %v127
    %v1739 = vmul.f32 %v1666, %v128
    %v1740 = vmul.f32 %v1671, %v129
    %v1741 = vmul.f32 %v1676, %v130
    %v1742 = vmul.f32 %v1681, %v131
    %v1743 = vmul.f32 %v1686, %v132
    %v1744 = vmul.f32 %v1691, %v133
    %v1745 = vmul.f32 %v1696, %v134
    %v1746 = vmul.f32 %v1701, %v135
    %v1747 = vmul.f32 %v1706, %v136
    %v1748 = vmul.f32 %v1711, %v137
    %v1749 = vmul.f32 %v1716, %v138
    %v1750 = vrot.slane %v1718, 4
    %v1751 = vadd.f32 %v1718, %v1750
    %v1752 = vrot.slane %v1751, 2
    %v1753 = vadd.f32 %v1751, %v1752
    %v1754 = vrot.slane %v1753, 1
    %v1755 = vadd.f32 %v1753, %v1754
    %v1756 = vrot.slane %v1719, 4
    %v1757 = vadd.f32 %v1719, %v1756
    %v1758 = vrot.slane %v1757, 2
    %v1759 = vadd.f32 %v1757, %v1758
    %v1760 = vrot.slane %v1759, 1
    %v1761 = vadd.f32 %v1759, %v1760
    %v1762 = vrot.slane %v1720, 4
    %v1763 = vadd.f32 %v1720, %v1762
    %v1764 = vrot.slane %v1763, 2
    %v1765 = vadd.f32 %v1763, %v1764
    %v1766 = vrot.slane %v1765, 1
    %v1767 = vadd.f32 %v1765, %v1766
    %v1768 = vrot.slane %v1721, 4
    %v1769 = vadd.f32 %v1721, %v1768
    %v1770 = vrot.slane %v1769, 2
    %v1771 = vadd.f32 %v1769, %v1770
    %v1772 = vrot.slane %v1771, 1
    %v1773 = vadd.f32 %v1771, %v1772
    %v1774 = vrot.slane %v1722, 4
    %v1775 = vadd.f32 %v1722, %v1774
    %v1776 = vrot.slane %v1775, 2
    %v1777 = vadd.f32 %v1775, %v1776
    %v1778 = vrot.slane %v1777, 1
    %v1779 = vadd.f32 %v1777, %v1778
    %v1780 = vrot.slane %v1723, 4
    %v1781 = vadd.f32 %v1723, %v1780
    %v1782 = vrot.slane %v1781, 2
    %v1783 = vadd.f32 %v1781, %v1782
    %v1784 = vrot.slane %v1783, 1
    %v1785 = vadd.f32 %v1783, %v1784
    %v1786 = vrot.slane %v1724, 4
    %v1787 = vadd.f32 %v1724, %v1786
    %v1788 = vrot.slane %v1787, 2
    %v1789 = vadd.f32 %v1787, %v1788
    %v1790 = vrot.slane %v1789, 1
    %v1791 = vadd.f32 %v1789, %v1790
    %v1792 = vrot.slane %v1725, 4
    %v1793 = vadd.f32 %v1725, %v1792
    %v1794 = vrot.slane %v1793, 2
    %v1795 = vadd.f32 %v1793, %v1794
    %v1796 = vrot.slane %v1795, 1
    %v1797 = vadd.f32 %v1795, %v1796
    %v1798 = vrot.slane %v1726, 4
    %v1799 = vadd.f32 %v1726, %v1798
    %v1800 = vrot.slane %v1799, 2
    %v1801 = vadd.f32 %v1799, %v1800
    %v1802 = vrot.slane %v1801, 1
    %v1803 = vadd.f32 %v1801, %v1802
    %v1804 = vrot.slane %v1727, 4
    %v1805 = vadd.f32 %v1727, %v1804
    %v1806 = vrot.slane %v1805, 2
    %v1807 = vadd.f32 %v1805, %v1806
    %v1808 = vrot.slane %v1807, 1
    %v1809 = vadd.f32 %v1807, %v1808
    %v1810 = vrot.slane %v1728, 4
    %v1811 = vadd.f32 %v1728, %v1810
    %v1812 = vrot.slane %v1811, 2
    %v1813 = vadd.f32 %v1811, %v1812
    %v1814 = vrot.slane %v1813, 1
    %v1815 = vadd.f32 %v1813, %v1814
    %v1816 = vrot.slane %v1729, 4
    %v1817 = vadd.f32 %v1729, %v1816
    %v1818 = vrot.slane %v1817, 2
    %v1819 = vadd.f32 %v1817, %v1818
    %v1820 = vrot.slane %v1819, 1
    %v1821 = vadd.f32 %v1819, %v1820
    %v1822 = vrot.slane %v1730, 4
    %v1823 = vadd.f32 %v1730, %v1822
    %v1824 = vrot.slane %v1823, 2
    %v1825 = vadd.f32 %v1823, %v1824
    %v1826 = vrot.slane %v1825, 1
    %v1827 = vadd.f32 %v1825, %v1826
    %v1828 = vrot.slane %v1731, 4
    %v1829 = vadd.f32 %v1731, %v1828
    %v1830 = vrot.slane %v1829, 2
    %v1831 = vadd.f32 %v1829, %v1830
    %v1832 = vrot.slane %v1831, 1
    %v1833 = vadd.f32 %v1831, %v1832
    %v1834 = vrot.slane %v1732, 4
    %v1835 = vadd.f32 %v1732, %v1834
    %v1836 = vrot.slane %v1835, 2
    %v1837 = vadd.f32 %v1835, %v1836
    %v1838 = vrot.slane %v1837, 1
    %v1839 = vadd.f32 %v1837, %v1838
    %v1840 = vrot.slane %v1733, 4
    %v1841 = vadd.f32 %v1733, %v1840
    %v1842 = vrot.slane %v1841, 2
    %v1843 = vadd.f32 %v1841, %v1842
    %v1844 = vrot.slane %v1843, 1
    %v1845 = vadd.f32 %v1843, %v1844
    %v1846 = vrot.slane %v1734, 4
    %v1847 = vadd.f32 %v1734, %v1846
    %v1848 = vrot.slane %v1847, 2
    %v1849 = vadd.f32 %v1847, %v1848
    %v1850 = vrot.slane %v1849, 1
    %v1851 = vadd.f32 %v1849, %v1850
    %v1852 = vrot.slane %v1735, 4
    %v1853 = vadd.f32 %v1735, %v1852
    %v1854 = vrot.slane %v1853, 2
    %v1855 = vadd.f32 %v1853, %v1854
    %v1856 = vrot.slane %v1855, 1
    %v1857 = vadd.f32 %v1855, %v1856
    %v1858 = vrot.slane %v1736, 4
    %v1859 = vadd.f32 %v1736, %v1858
    %v1860 = vrot.slane %v1859, 2
    %v1861 = vadd.f32 %v1859, %v1860
    %v1862 = vrot.slane %v1861, 1
    %v1863 = vadd.f32 %v1861, %v1862
    %v1864 = vrot.slane %v1737, 4
    %v1865 = vadd.f32 %v1737, %v1864
    %v1866 = vrot.slane %v1865, 2
    %v1867 = vadd.f32 %v1865, %v1866
    %v1868 = vrot.slane %v1867, 1
    %v1869 = vadd.f32 %v1867, %v1868
    %v1870 = vrot.slane %v1738, 4
    %v1871 = vadd.f32 %v1738, %v1870
    %v1872 = vrot.slane %v1871, 2
    %v1873 = vadd.f32 %v1871, %v1872
    %v1874 = vrot.slane %v1873, 1
    %v1875 = vadd.f32 %v1873, %v1874
    %v1876 = vrot.slane %v1739, 4
    %v1877 = vadd.f32 %v1739, %v1876
    %v1878 = vrot.slane %v1877, 2
    %v1879 = vadd.f32 %v1877, %v1878
    %v1880 = vrot.slane %v1879, 1
    %v1881 = vadd.f32 %v1879, %v1880
    %v1882 = vrot.slane %v1740, 4
    %v1883 = vadd.f32 %v1740, %v1882
    %v1884 = vrot.slane %v1883, 2
    %v1885 = vadd.f32 %v1883, %v1884
    %v1886 = vrot.slane %v1885, 1
    %v1887 = vadd.f32 %v1885, %v1886
    %v1888 = vrot.slane %v1741, 4
    %v1889 = vadd.f32 %v1741, %v1888
    %v1890 = vrot.slane %v1889, 2
    %v1891 = vadd.f32 %v1889, %v1890
    %v1892 = vrot.slane %v1891, 1
    %v1893 = vadd.f32 %v1891, %v1892
    %v1894 = vrot.slane %v1742, 4
    %v1895 = vadd.f32 %v1742, %v1894
    %v1896 = vrot.slane %v1895, 2
    %v1897 = vadd.f32 %v1895, %v1896
    %v1898 = vrot.slane %v1897, 1
    %v1899 = vadd.f32 %v1897, %v1898
    %v1900 = vrot.slane %v1743, 4
    %v1901 = vadd.f32 %v1743, %v1900
    %v1902 = vrot.slane %v1901, 2
    %v1903 = vadd.f32 %v1901, %v1902
    %v1904 = vrot.slane %v1903, 1
    %v1905 = vadd.f32 %v1903, %v1904
    %v1906 = vrot.slane %v1744, 4
    %v1907 = vadd.f32 %v1744, %v1906
    %v1908 = vrot.slane %v1907, 2
    %v1909 = vadd.f32 %v1907, %v1908
    %v1910 = vrot.slane %v1909, 1
    %v1911 = vadd.f32 %v1909, %v1910
    %v1912 = vrot.slane %v1745, 4
    %v1913 = vadd.f32 %v1745, %v1912
    %v1914 = vrot.slane %v1913, 2
    %v1915 = vadd.f32 %v1913, %v1914
    %v1916 = vrot.slane %v1915, 1
    %v1917 = vadd.f32 %v1915, %v1916
    %v1918 = vrot.slane %v1746, 4
    %v1919 = vadd.f32 %v1746, %v1918
    %v1920 = vrot.slane %v1919, 2
    %v1921 = vadd.f32 %v1919, %v1920
    %v1922 = vrot.slane %v1921, 1
    %v1923 = vadd.f32 %v1921, %v1922
    %v1924 = vrot.slane %v1747, 4
    %v1925 = vadd.f32 %v1747, %v1924
    %v1926 = vrot.slane %v1925, 2
    %v1927 = vadd.f32 %v1925, %v1926
    %v1928 = vrot.slane %v1927, 1
    %v1929 = vadd.f32 %v1927, %v1928
    %v1930 = vrot.slane %v1748, 4
    %v1931 = vadd.f32 %v1748, %v1930
    %v1932 = vrot.slane %v1931, 2
    %v1933 = vadd.f32 %v1931, %v1932
    %v1934 = vrot.slane %v1933, 1
    %v1935 = vadd.f32 %v1933, %v1934
    %v1936 = vrot.slane %v1749, 4
    %v1937 = vadd.f32 %v1749, %v1936
    %v1938 = vrot.slane %v1937, 2
    %v1939 = vadd.f32 %v1937, %v1938
    %v1940 = vrot.slane %v1939, 1
    %v1941 = vadd.f32 %v1939, %v1940
    %v1942 = vld [vmem:[#allocation4] sm:$0xff]
    %v1943 = vld [vmem:[#allocation4 + $0x8] sm:$0xff]
    %v1944 = vld [vmem:[#allocation4 + $0x10] sm:$0xff]
    %v1945 = vld [vmem:[#allocation4 + $0x18] sm:$0xff]
    %v1950 = vrot.slane %v1942, 1
    %v1951 = vrot.slane %v1942, 2
    %v1952 = vrot.slane %v1942, 3
    %v1953 = vrot.slane %v1942, 4
    %v1954 = vrot.slane %v1942, 5
    %v1955 = vrot.slane %v1942, 6
    %v1956 = vrot.slane %v1942, 7
    %v1957 = vrot.slane %v1943, 1
    %v1958 = vrot.slane %v1943, 2
    %v1959 = vrot.slane %v1943, 3
    %v1960 = vrot.slane %v1943, 4
    %v1961 = vrot.slane %v1943, 5
    %v1962 = vrot.slane %v1943, 6
    %v1963 = vrot.slane %v1943, 7
    %v1964 = vrot.slane %v1944, 1
    %v1965 = vrot.slane %v1944, 2
    %v1966 = vrot.slane %v1944, 3
    %v1967 = vrot.slane %v1944, 4
    %v1968 = vrot.slane %v1944, 5
    %v1969 = vrot.slane %v1944, 6
    %v1970 = vrot.slane %v1944, 7
    %v1971 = vrot.slane %v1945, 1
    %v1972 = vrot.slane %v1945, 2
    %v1973 = vrot.slane %v1945, 3
    %v1974 = vrot.slane %v1945, 4
    %v1975 = vrot.slane %v1945, 5
    %v1976 = vrot.slane %v1945, 6
    %v1977 = vrot.slane %v1945, 7
    %v2010 = vadd.f32 %v1755, %v1942
    %v2011 = vadd.f32 %v1761, %v1950
    %v2012 = vadd.f32 %v1767, %v1951
    %v2013 = vadd.f32 %v1773, %v1952
    %v2014 = vadd.f32 %v1779, %v1953
    %v2015 = vadd.f32 %v1785, %v1954
    %v2016 = vadd.f32 %v1791, %v1955
    %v2017 = vadd.f32 %v1797, %v1956
    %v2018 = vadd.f32 %v1803, %v1943
    %v2019 = vadd.f32 %v1809, %v1957
    %v2020 = vadd.f32 %v1815, %v1958
    %v2021 = vadd.f32 %v1821, %v1959
    %v2022 = vadd.f32 %v1827, %v1960
    %v2023 = vadd.f32 %v1833, %v1961
    %v2024 = vadd.f32 %v1839, %v1962
    %v2025 = vadd.f32 %v1845, %v1963
    %v2026 = vadd.f32 %v1851, %v1944
    %v2027 = vadd.f32 %v1857, %v1964
    %v2028 = vadd.f32 %v1863, %v1965
    %v2029 = vadd.f32 %v1869, %v1966
    %v2030 = vadd.f32 %v1875, %v1967
    %v2031 = vadd.f32 %v1881, %v1968
    %v2032 = vadd.f32 %v1887, %v1969
    %v2033 = vadd.f32 %v1893, %v1970
    %v2034 = vadd.f32 %v1899, %v1945
    %v2035 = vadd.f32 %v1905, %v1971
    %v2036 = vadd.f32 %v1911, %v1972
    %v2037 = vadd.f32 %v1917, %v1973
    %v2038 = vadd.f32 %v1923, %v1974
    %v2039 = vadd.f32 %v1929, %v1975
    %v2040 = vadd.f32 %v1935, %v1976
    %v2041 = vadd.f32 %v1941, %v1977
    %v2074 = vrot.slane %v2011, 7
    %v2075 = vsel %vm718, %v2074, %v2010
    %v2076 = vrot.slane %v2012, 6
    %v2077 = vsel %vm720, %v2076, %v2075
    %v2078 = vrot.slane %v2013, 5
    %v2079 = vsel %vm722, %v2078, %v2077
    %v2080 = vrot.slane %v2014, 4
    %v2081 = vsel %vm724, %v2080, %v2079
    %v2082 = vrot.slane %v2015, 3
    %v2083 = vsel %vm726, %v2082, %v2081
    %v2084 = vrot.slane %v2016, 2
    %v2085 = vsel %vm728, %v2084, %v2083
    %v2086 = vrot.slane %v2017, 1
    %v2087 = vsel %vm730, %v2086, %v2085
    %v2088 = vrot.slane %v2019, 7
    %v2089 = vsel %vm718, %v2088, %v2018
    %v2090 = vrot.slane %v2020, 6
    %v2091 = vsel %vm720, %v2090, %v2089
    %v2092 = vrot.slane %v2021, 5
    %v2093 = vsel %vm722, %v2092, %v2091
    %v2094 = vrot.slane %v2022, 4
    %v2095 = vsel %vm724, %v2094, %v2093
    %v2096 = vrot.slane %v2023, 3
    %v2097 = vsel %vm726, %v2096, %v2095
    %v2098 = vrot.slane %v2024, 2
    %v2099 = vsel %vm728, %v2098, %v2097
    %v2100 = vrot.slane %v2025, 1
    %v2101 = vsel %vm730, %v2100, %v2099
    %v2102 = vrot.slane %v2027, 7
    %v2103 = vsel %vm718, %v2102, %v2026
    %v2104 = vrot.slane %v2028, 6
    %v2105 = vsel %vm720, %v2104, %v2103
    %v2106 = vrot.slane %v2029, 5
    %v2107 = vsel %vm722, %v2106, %v2105
    %v2108 = vrot.slane %v2030, 4
    %v2109 = vsel %vm724, %v2108, %v2107
    %v2110 = vrot.slane %v2031, 3
    %v2111 = vsel %vm726, %v2110, %v2109
    %v2112 = vrot.slane %v2032, 2
    %v2113 = vsel %vm728, %v2112, %v2111
    %v2114 = vrot.slane %v2033, 1
    %v2115 = vsel %vm730, %v2114, %v2113
    %v2116 = vrot.slane %v2035, 7
    %v2117 = vsel %vm718, %v2116, %v2034
    %v2118 = vrot.slane %v2036, 6
    %v2119 = vsel %vm720, %v2118, %v2117
    %v2120 = vrot.slane %v2037, 5
    %v2121 = vsel %vm722, %v2120, %v2119
    %v2122 = vrot.slane %v2038, 4
    %v2123 = vsel %vm724, %v2122, %v2121
    %v2124 = vrot.slane %v2039, 3
    %v2125 = vsel %vm726, %v2124, %v2123
    %v2126 = vrot.slane %v2040, 2
    %v2127 = vsel %vm728, %v2126, %v2125
    %v2128 = vrot.slane %v2041, 1
    %v2129 = vsel %vm730, %v2128, %v2127
    %2134 = vadd.xlane.f32.xlu0 %v2087
    %v2135 = vpop.xlane.xlu0 %2134
    %2136 = vadd.xlane.f32.xlu0 %v2101
    %v2137 = vpop.xlane.xlu0 %2136
    %2138 = vadd.xlane.f32.xlu0 %v2115
    %v2139 = vpop.xlane.xlu0 %2138
    %2140 = vadd.xlane.f32.xlu0 %v2129
    %v2141 = vpop.xlane.xlu0 %2140
    %v2142 = vrcp.pop 128.0
    %v2143 = vmul.f32 %v2135, %v2142
    %v2144 = vmul.f32 %v2137, %v2142
    %v2145 = vmul.f32 %v2139, %v2142
    %v2146 = vmul.f32 %v2141, %v2142
    %v2151 = vrot.slane %v2143, 1
    %v2152 = vrot.slane %v2143, 2
    %v2153 = vrot.slane %v2143, 3
    %v2154 = vrot.slane %v2143, 4
    %v2155 = vrot.slane %v2143, 5
    %v2156 = vrot.slane %v2143, 6
    %v2157 = vrot.slane %v2143, 7
    %v2158 = vrot.slane %v2144, 1
    %v2159 = vrot.slane %v2144, 2
    %v2160 = vrot.slane %v2144, 3
    %v2161 = vrot.slane %v2144, 4
    %v2162 = vrot.slane %v2144, 5
    %v2163 = vrot.slane %v2144, 6
    %v2164 = vrot.slane %v2144, 7
    %v2165 = vrot.slane %v2145, 1
    %v2166 = vrot.slane %v2145, 2
    %v2167 = vrot.slane %v2145, 3
    %v2168 = vrot.slane %v2145, 4
    %v2169 = vrot.slane %v2145, 5
    %v2170 = vrot.slane %v2145, 6
    %v2171 = vrot.slane %v2145, 7
    %v2172 = vrot.slane %v2146, 1
    %v2173 = vrot.slane %v2146, 2
    %v2174 = vrot.slane %v2146, 3
    %v2175 = vrot.slane %v2146, 4
    %v2176 = vrot.slane %v2146, 5
    %v2177 = vrot.slane %v2146, 6
    %v2178 = vrot.slane %v2146, 7
    %v2211 = vsub.f32 %v2010, %v2143
    %v2212 = vsub.f32 %v2011, %v2151
    %v2213 = vsub.f32 %v2012, %v2152
    %v2214 = vsub.f32 %v2013, %v2153
    %v2215 = vsub.f32 %v2014, %v2154
    %v2216 = vsub.f32 %v2015, %v2155
    %v2217 = vsub.f32 %v2016, %v2156
    %v2218 = vsub.f32 %v2017, %v2157
    %v2219 = vsub.f32 %v2018, %v2144
    %v2220 = vsub.f32 %v2019, %v2158
    %v2221 = vsub.f32 %v2020, %v2159
    %v2222 = vsub.f32 %v2021, %v2160
    %v2223 = vsub.f32 %v2022, %v2161
    %v2224 = vsub.f32 %v2023, %v2162
    %v2225 = vsub.f32 %v2024, %v2163
    %v2226 = vsub.f32 %v2025, %v2164
    %v2227 = vsub.f32 %v2026, %v2145
    %v2228 = vsub.f32 %v2027, %v2165
    %v2229 = vsub.f32 %v2028, %v2166
    %v2230 = vsub.f32 %v2029, %v2167
    %v2231 = vsub.f32 %v2030, %v2168
    %v2232 = vsub.f32 %v2031, %v2169
    %v2233 = vsub.f32 %v2032, %v2170
    %v2234 = vsub.f32 %v2033, %v2171
    %v2235 = vsub.f32 %v2034, %v2146
    %v2236 = vsub.f32 %v2035, %v2172
    %v2237 = vsub.f32 %v2036, %v2173
    %v2238 = vsub.f32 %v2037, %v2174
    %v2239 = vsub.f32 %v2038, %v2175
    %v2240 = vsub.f32 %v2039, %v2176
    %v2241 = vsub.f32 %v2040, %v2177
    %v2242 = vsub.f32 %v2041, %v2178
    %v2243 = vmul.f32 %v2211, %v2211
    %v2244 = vmul.f32 %v2212, %v2212
    %v2245 = vmul.f32 %v2213, %v2213
    %v2246 = vmul.f32 %v2214, %v2214
    %v2247 = vmul.f32 %v2215, %v2215
    %v2248 = vmul.f32 %v2216, %v2216
    %v2249 = vmul.f32 %v2217, %v2217
    %v2250 = vmul.f32 %v2218, %v2218
    %v2251 = vmul.f32 %v2219, %v2219
    %v2252 = vmul.f32 %v2220, %v2220
    %v2253 = vmul.f32 %v2221, %v2221
    %v2254 = vmul.f32 %v2222, %v2222
    %v2255 = vmul.f32 %v2223, %v2223
    %v2256 = vmul.f32 %v2224, %v2224
    %v2257 = vmul.f32 %v2225, %v2225
    %v2258 = vmul.f32 %v2226, %v2226
    %v2259 = vmul.f32 %v2227, %v2227
    %v2260 = vmul.f32 %v2228, %v2228
    %v2261 = vmul.f32 %v2229, %v2229
    %v2262 = vmul.f32 %v2230, %v2230
    %v2263 = vmul.f32 %v2231, %v2231
    %v2264 = vmul.f32 %v2232, %v2232
    %v2265 = vmul.f32 %v2233, %v2233
    %v2266 = vmul.f32 %v2234, %v2234
    %v2267 = vmul.f32 %v2235, %v2235
    %v2268 = vmul.f32 %v2236, %v2236
    %v2269 = vmul.f32 %v2237, %v2237
    %v2270 = vmul.f32 %v2238, %v2238
    %v2271 = vmul.f32 %v2239, %v2239
    %v2272 = vmul.f32 %v2240, %v2240
    %v2273 = vmul.f32 %v2241, %v2241
    %v2274 = vmul.f32 %v2242, %v2242
    %v2307 = vrot.slane %v2244, 7
    %v2308 = vsel %vm718, %v2307, %v2243
    %v2309 = vrot.slane %v2245, 6
    %v2310 = vsel %vm720, %v2309, %v2308
    %v2311 = vrot.slane %v2246, 5
    %v2312 = vsel %vm722, %v2311, %v2310
    %v2313 = vrot.slane %v2247, 4
    %v2314 = vsel %vm724, %v2313, %v2312
    %v2315 = vrot.slane %v2248, 3
    %v2316 = vsel %vm726, %v2315, %v2314
    %v2317 = vrot.slane %v2249, 2
    %v2318 = vsel %vm728, %v2317, %v2316
    %v2319 = vrot.slane %v2250, 1
    %v2320 = vsel %vm730, %v2319, %v2318
    %v2321 = vrot.slane %v2252, 7
    %v2322 = vsel %vm718, %v2321, %v2251
    %v2323 = vrot.slane %v2253, 6
    %v2324 = vsel %vm720, %v2323, %v2322
    %v2325 = vrot.slane %v2254, 5
    %v2326 = vsel %vm722, %v2325, %v2324
    %v2327 = vrot.slane %v2255, 4
    %v2328 = vsel %vm724, %v2327, %v2326
    %v2329 = vrot.slane %v2256, 3
    %v2330 = vsel %vm726, %v2329, %v2328
    %v2331 = vrot.slane %v2257, 2
    %v2332 = vsel %vm728, %v2331, %v2330
    %v2333 = vrot.slane %v2258, 1
    %v2334 = vsel %vm730, %v2333, %v2332
    %v2335 = vrot.slane %v2260, 7
    %v2336 = vsel %vm718, %v2335, %v2259
    %v2337 = vrot.slane %v2261, 6
    %v2338 = vsel %vm720, %v2337, %v2336
    %v2339 = vrot.slane %v2262, 5
    %v2340 = vsel %vm722, %v2339, %v2338
    %v2341 = vrot.slane %v2263, 4
    %v2342 = vsel %vm724, %v2341, %v2340
    %v2343 = vrot.slane %v2264, 3
    %v2344 = vsel %vm726, %v2343, %v2342
    %v2345 = vrot.slane %v2265, 2
    %v2346 = vsel %vm728, %v2345, %v2344
    %v2347 = vrot.slane %v2266, 1
    %v2348 = vsel %vm730, %v2347, %v2346
    %v2349 = vrot.slane %v2268, 7
    %v2350 = vsel %vm718, %v2349, %v2267
    %v2351 = vrot.slane %v2269, 6
    %v2352 = vsel %vm720, %v2351, %v2350
    %v2353 = vrot.slane %v2270, 5
    %v2354 = vsel %vm722, %v2353, %v2352
    %v2355 = vrot.slane %v2271, 4
    %v2356 = vsel %vm724, %v2355, %v2354
    %v2357 = vrot.slane %v2272, 3
    %v2358 = vsel %vm726, %v2357, %v2356
    %v2359 = vrot.slane %v2273, 2
    %v2360 = vsel %vm728, %v2359, %v2358
    %v2361 = vrot.slane %v2274, 1
    %v2362 = vsel %vm730, %v2361, %v2360
    %2367 = vadd.xlane.f32.xlu0 %v2320
    %v2368 = vpop.xlane.xlu0 %2367
    %2369 = vadd.xlane.f32.xlu0 %v2334
    %v2370 = vpop.xlane.xlu0 %2369
    %2371 = vadd.xlane.f32.xlu0 %v2348
    %v2372 = vpop.xlane.xlu0 %2371
    %2373 = vadd.xlane.f32.xlu0 %v2362
    %v2374 = vpop.xlane.xlu0 %2373
    %v2375 = vmul.f32 %v2368, %v2142
    %v2376 = vmul.f32 %v2370, %v2142
    %v2377 = vmul.f32 %v2372, %v2142
    %v2378 = vmul.f32 %v2374, %v2142
    %v2379 = vadd.f32 %v2375, 1e-05
    %v2380 = vadd.f32 %v2376, 1e-05
    %v2381 = vadd.f32 %v2377, 1e-05
    %v2382 = vadd.f32 %v2378, 1e-05
    %v2383 = vrsqrt.pop %v2379
    %v2384 = vrsqrt.pop %v2380
    %v2385 = vrsqrt.pop %v2381
    %v2386 = vrsqrt.pop %v2382
    %v2391 = vrot.slane %v2383, 1
    %v2392 = vrot.slane %v2383, 2
    %v2393 = vrot.slane %v2383, 3
    %v2394 = vrot.slane %v2383, 4
    %v2395 = vrot.slane %v2383, 5
    %v2396 = vrot.slane %v2383, 6
    %v2397 = vrot.slane %v2383, 7
    %v2398 = vrot.slane %v2384, 1
    %v2399 = vrot.slane %v2384, 2
    %v2400 = vrot.slane %v2384, 3
    %v2401 = vrot.slane %v2384, 4
    %v2402 = vrot.slane %v2384, 5
    %v2403 = vrot.slane %v2384, 6
    %v2404 = vrot.slane %v2384, 7
    %v2405 = vrot.slane %v2385, 1
    %v2406 = vrot.slane %v2385, 2
    %v2407 = vrot.slane %v2385, 3
    %v2408 = vrot.slane %v2385, 4
    %v2409 = vrot.slane %v2385, 5
    %v2410 = vrot.slane %v2385, 6
    %v2411 = vrot.slane %v2385, 7
    %v2412 = vrot.slane %v2386, 1
    %v2413 = vrot.slane %v2386, 2
    %v2414 = vrot.slane %v2386, 3
    %v2415 = vrot.slane %v2386, 4
    %v2416 = vrot.slane %v2386, 5
    %v2417 = vrot.slane %v2386, 6
    %v2418 = vrot.slane %v2386, 7
    %v2451 = vmul.f32 %v2211, %v2383
    %v2452 = vmul.f32 %v2212, %v2391
    %v2453 = vmul.f32 %v2213, %v2392
    %v2454 = vmul.f32 %v2214, %v2393
    %v2455 = vmul.f32 %v2215, %v2394
    %v2456 = vmul.f32 %v2216, %v2395
    %v2457 = vmul.f32 %v2217, %v2396
    %v2458 = vmul.f32 %v2218, %v2397
    %v2459 = vmul.f32 %v2219, %v2384
    %v2460 = vmul.f32 %v2220, %v2398
    %v2461 = vmul.f32 %v2221, %v2399
    %v2462 = vmul.f32 %v2222, %v2400
    %v2463 = vmul.f32 %v2223, %v2401
    %v2464 = vmul.f32 %v2224, %v2402
    %v2465 = vmul.f32 %v2225, %v2403
    %v2466 = vmul.f32 %v2226, %v2404
    %v2467 = vmul.f32 %v2227, %v2385
    %v2468 = vmul.f32 %v2228, %v2405
    %v2469 = vmul.f32 %v2229, %v2406
    %v2470 = vmul.f32 %v2230, %v2407
    %v2471 = vmul.f32 %v2231, %v2408
    %v2472 = vmul.f32 %v2232, %v2409
    %v2473 = vmul.f32 %v2233, %v2410
    %v2474 = vmul.f32 %v2234, %v2411
    %v2475 = vmul.f32 %v2235, %v2386
    %v2476 = vmul.f32 %v2236, %v2412
    %v2477 = vmul.f32 %v2237, %v2413
    %v2478 = vmul.f32 %v2238, %v2414
    %v2479 = vmul.f32 %v2239, %v2415
    %v2480 = vmul.f32 %v2240, %v2416
    %v2481 = vmul.f32 %v2241, %v2417
    %v2482 = vmul.f32 %v2242, %v2418
    %v2483 = vlaneseq
    %v2484 = vshrl.u32 %v2483, 7
    %v2485 = vsub.s32 0, %v2484
    %v2486 = vrot.slane %v141, %v2485
    %v2487 = vmul.f32 %v2451, %v2486
    %v2488 = vmul.f32 %v2452, %v2486
    %v2489 = vmul.f32 %v2453, %v2486
    %v2490 = vmul.f32 %v2454, %v2486
    %v2491 = vmul.f32 %v2455, %v2486
    %v2492 = vmul.f32 %v2456, %v2486
    %v2493 = vmul.f32 %v2457, %v2486
    %v2494 = vmul.f32 %v2458, %v2486
    %v2495 = vmul.f32 %v2459, %v2486
    %v2496 = vmul.f32 %v2460, %v2486
    %v2497 = vmul.f32 %v2461, %v2486
    %v2498 = vmul.f32 %v2462, %v2486
    %v2499 = vmul.f32 %v2463, %v2486
    %v2500 = vmul.f32 %v2464, %v2486
    %v2501 = vmul.f32 %v2465, %v2486
    %v2502 = vmul.f32 %v2466, %v2486
    %v2503 = vmul.f32 %v2467, %v2486
    %v2504 = vmul.f32 %v2468, %v2486
    %v2505 = vmul.f32 %v2469, %v2486
    %v2506 = vmul.f32 %v2470, %v2486
    %v2507 = vmul.f32 %v2471, %v2486
    %v2508 = vmul.f32 %v2472, %v2486
    %v2509 = vmul.f32 %v2473, %v2486
    %v2510 = vmul.f32 %v2474, %v2486
    %v2511 = vmul.f32 %v2475, %v2486
    %v2512 = vmul.f32 %v2476, %v2486
    %v2513 = vmul.f32 %v2477, %v2486
    %v2514 = vmul.f32 %v2478, %v2486
    %v2515 = vmul.f32 %v2479, %v2486
    %v2516 = vmul.f32 %v2480, %v2486
    %v2517 = vmul.f32 %v2481, %v2486
    %v2518 = vmul.f32 %v2482, %v2486
    %v2519 = vlaneseq
    %v2520 = vshrl.u32 %v2519, 7
    %v2521 = vsub.s32 0, %v2520
    %v2522 = vrot.slane %v142, %v2521
    %v2523 = vadd.f32 %v2487, %v2522
    %v2524 = vadd.f32 %v2488, %v2522
    %v2525 = vadd.f32 %v2489, %v2522
    %v2526 = vadd.f32 %v2490, %v2522
    %v2527 = vadd.f32 %v2491, %v2522
    %v2528 = vadd.f32 %v2492, %v2522
    %v2529 = vadd.f32 %v2493, %v2522
    %v2530 = vadd.f32 %v2494, %v2522
    %v2531 = vadd.f32 %v2495, %v2522
    %v2532 = vadd.f32 %v2496, %v2522
    %v2533 = vadd.f32 %v2497, %v2522
    %v2534 = vadd.f32 %v2498, %v2522
    %v2535 = vadd.f32 %v2499, %v2522
    %v2536 = vadd.f32 %v2500, %v2522
    %v2537 = vadd.f32 %v2501, %v2522
    %v2538 = vadd.f32 %v2502, %v2522
    %v2539 = vadd.f32 %v2503, %v2522
    %v2540 = vadd.f32 %v2504, %v2522
    %v2541 = vadd.f32 %v2505, %v2522
    %v2542 = vadd.f32 %v2506, %v2522
    %v2543 = vadd.f32 %v2507, %v2522
    %v2544 = vadd.f32 %v2508, %v2522
    %v2545 = vadd.f32 %v2509, %v2522
    %v2546 = vadd.f32 %v2510, %v2522
    %v2547 = vadd.f32 %v2511, %v2522
    %v2548 = vadd.f32 %v2512, %v2522
    %v2549 = vadd.f32 %v2513, %v2522
    %v2550 = vadd.f32 %v2514, %v2522
    %v2551 = vadd.f32 %v2515, %v2522
    %v2552 = vadd.f32 %v2516, %v2522
    %v2553 = vadd.f32 %v2517, %v2522
    %v2554 = vadd.f32 %v2518, %v2522
    %v2555 = vpack.c.bf16 %v2523, %v2523
    %v2556 = vpack.c.bf16 %v2524, %v2524
    %v2557 = vpack.c.bf16 %v2525, %v2525
    %v2558 = vpack.c.bf16 %v2526, %v2526
    %v2559 = vpack.c.bf16 %v2527, %v2527
    %v2560 = vpack.c.bf16 %v2528, %v2528
    %v2561 = vpack.c.bf16 %v2529, %v2529
    %v2562 = vpack.c.bf16 %v2530, %v2530
    %v2563 = vpack.c.bf16 %v2531, %v2531
    %v2564 = vpack.c.bf16 %v2532, %v2532
    %v2565 = vpack.c.bf16 %v2533, %v2533
    %v2566 = vpack.c.bf16 %v2534, %v2534
    %v2567 = vpack.c.bf16 %v2535, %v2535
    %v2568 = vpack.c.bf16 %v2536, %v2536
    %v2569 = vpack.c.bf16 %v2537, %v2537
    %v2570 = vpack.c.bf16 %v2538, %v2538
    %v2571 = vpack.c.bf16 %v2539, %v2539
    %v2572 = vpack.c.bf16 %v2540, %v2540
    %v2573 = vpack.c.bf16 %v2541, %v2541
    %v2574 = vpack.c.bf16 %v2542, %v2542
    %v2575 = vpack.c.bf16 %v2543, %v2543
    %v2576 = vpack.c.bf16 %v2544, %v2544
    %v2577 = vpack.c.bf16 %v2545, %v2545
    %v2578 = vpack.c.bf16 %v2546, %v2546
    %v2579 = vpack.c.bf16 %v2547, %v2547
    %v2580 = vpack.c.bf16 %v2548, %v2548
    %v2581 = vpack.c.bf16 %v2549, %v2549
    %v2582 = vpack.c.bf16 %v2550, %v2550
    %v2583 = vpack.c.bf16 %v2551, %v2551
    %v2584 = vpack.c.bf16 %v2552, %v2552
    %v2585 = vpack.c.bf16 %v2553, %v2553
    %v2586 = vpack.c.bf16 %v2554, %v2554
    %v2587 = vld [vmem:[#allocation9] sm:$0xf]
    %v2588 = vld [vmem:[#allocation9 + $0x4] sm:$0xf]
    %v2589 = vld [vmem:[#allocation9 + $0x8] sm:$0xf]
    %v2590 = vld [vmem:[#allocation9 + $0xc] sm:$0xf]
    %v2591 = vld [vmem:[#allocation9 + $0x10] sm:$0xf]
    %v2592 = vld [vmem:[#allocation9 + $0x14] sm:$0xf]
    %v2593 = vld [vmem:[#allocation9 + $0x18] sm:$0xf]
    %v2594 = vld [vmem:[#allocation9 + $0x1c] sm:$0xf]
    %v2595 = vld [vmem:[#allocation9 + $0x20] sm:$0xf]
    %v2596 = vld [vmem:[#allocation9 + $0x24] sm:$0xf]
    %v2597 = vld [vmem:[#allocation9 + $0x28] sm:$0xf]
    %v2598 = vld [vmem:[#allocation9 + $0x2c] sm:$0xf]
    %v2599 = vld [vmem:[#allocation9 + $0x30] sm:$0xf]
    %v2600 = vld [vmem:[#allocation9 + $0x34] sm:$0xf]
    %v2601 = vld [vmem:[#allocation9 + $0x38] sm:$0xf]
    %v2602 = vld [vmem:[#allocation9 + $0x3c] sm:$0xf]
    %v2603 = vlaneseq
    %v2604 = vshrl.u32 %v2603, 7
    %v2605 = vsub.s32 0, %v2604
    %v2606 = vrot.slane %v143, %v2605
    %v2639 = vunpack.c.l.b16 %v2555
    %v2640 = vunpack.c.l.b16 %v2556
    %v2641 = vunpack.c.l.b16 %v2557
    %v2642 = vunpack.c.l.b16 %v2558
    %v2643 = vunpack.c.l.b16 %v2559
    %v2644 = vunpack.c.l.b16 %v2560
    %v2645 = vunpack.c.l.b16 %v2561
    %v2646 = vunpack.c.l.b16 %v2562
    %v2647 = vunpack.c.l.b16 %v2563
    %v2648 = vunpack.c.l.b16 %v2564
    %v2649 = vunpack.c.l.b16 %v2565
    %v2650 = vunpack.c.l.b16 %v2566
    %v2651 = vunpack.c.l.b16 %v2567
    %v2652 = vunpack.c.l.b16 %v2568
    %v2653 = vunpack.c.l.b16 %v2569
    %v2654 = vunpack.c.l.b16 %v2570
    %v2655 = vunpack.c.l.b16 %v2571
    %v2656 = vunpack.c.l.b16 %v2572
    %v2657 = vunpack.c.l.b16 %v2573
    %v2658 = vunpack.c.l.b16 %v2574
    %v2659 = vunpack.c.l.b16 %v2575
    %v2660 = vunpack.c.l.b16 %v2576
    %v2661 = vunpack.c.l.b16 %v2577
    %v2662 = vunpack.c.l.b16 %v2578
    %v2663 = vunpack.c.l.b16 %v2579
    %v2664 = vunpack.c.l.b16 %v2580
    %v2665 = vunpack.c.l.b16 %v2581
    %v2666 = vunpack.c.l.b16 %v2582
    %v2667 = vunpack.c.l.b16 %v2583
    %v2668 = vunpack.c.l.b16 %v2584
    %v2669 = vunpack.c.l.b16 %v2585
    %v2670 = vunpack.c.l.b16 %v2586
    %v2671 = vrot.slane %v2640, 7
    %v2672 = vsel %vm718, %v2671, %v2639
    %v2673 = vrot.slane %v2641, 6
    %v2674 = vsel %vm720, %v2673, %v2672
    %v2675 = vrot.slane %v2642, 5
    %v2676 = vsel %vm722, %v2675, %v2674
    %v2677 = vrot.slane %v2643, 4
    %v2678 = vsel %vm724, %v2677, %v2676
    %v2679 = vrot.slane %v2644, 3
    %v2680 = vsel %vm726, %v2679, %v2678
    %v2681 = vrot.slane %v2645, 2
    %v2682 = vsel %vm728, %v2681, %v2680
    %v2683 = vrot.slane %v2646, 1
    %v2684 = vsel %vm730, %v2683, %v2682
    %v2685 = vrot.slane %v2648, 7
    %v2686 = vsel %vm718, %v2685, %v2647
    %v2687 = vrot.slane %v2649, 6
    %v2688 = vsel %vm720, %v2687, %v2686
    %v2689 = vrot.slane %v2650, 5
    %v2690 = vsel %vm722, %v2689, %v2688
    %v2691 = vrot.slane %v2651, 4
    %v2692 = vsel %vm724, %v2691, %v2690
    %v2693 = vrot.slane %v2652, 3
    %v2694 = vsel %vm726, %v2693, %v2692
    %v2695 = vrot.slane %v2653, 2
    %v2696 = vsel %vm728, %v2695, %v2694
    %v2697 = vrot.slane %v2654, 1
    %v2698 = vsel %vm730, %v2697, %v2696
    %v2699 = vrot.slane %v2656, 7
    %v2700 = vsel %vm718, %v2699, %v2655
    %v2701 = vrot.slane %v2657, 6
    %v2702 = vsel %vm720, %v2701, %v2700
    %v2703 = vrot.slane %v2658, 5
    %v2704 = vsel %vm722, %v2703, %v2702
    %v2705 = vrot.slane %v2659, 4
    %v2706 = vsel %vm724, %v2705, %v2704
    %v2707 = vrot.slane %v2660, 3
    %v2708 = vsel %vm726, %v2707, %v2706
    %v2709 = vrot.slane %v2661, 2
    %v2710 = vsel %vm728, %v2709, %v2708
    %v2711 = vrot.slane %v2662, 1
    %v2712 = vsel %vm730, %v2711, %v2710
    %v2713 = vrot.slane %v2664, 7
    %v2714 = vsel %vm718, %v2713, %v2663
    %v2715 = vrot.slane %v2665, 6
    %v2716 = vsel %vm720, %v2715, %v2714
    %v2717 = vrot.slane %v2666, 5
    %v2718 = vsel %vm722, %v2717, %v2716
    %v2719 = vrot.slane %v2667, 4
    %v2720 = vsel %vm724, %v2719, %v2718
    %v2721 = vrot.slane %v2668, 3
    %v2722 = vsel %vm726, %v2721, %v2720
    %v2723 = vrot.slane %v2669, 2
    %v2724 = vsel %vm728, %v2723, %v2722
    %v2725 = vrot.slane %v2670, 1
    %v2726 = vsel %vm730, %v2725, %v2724
    %v2727 = vpack.c.b16 %v2698, %v2684
    %v2728 = vpack.c.b16 %v2726, %v2712
    %v2747 = vunpack.c.l.b16 %v2587
    %v2748 = vunpack.c.l.b16 %v2588
    %v2749 = vunpack.c.l.b16 %v2589
    %v2750 = vunpack.c.l.b16 %v2590
    %v2751 = vunpack.c.l.b16 %v2591
    %v2752 = vunpack.c.l.b16 %v2592
    %v2753 = vunpack.c.l.b16 %v2593
    %v2754 = vunpack.c.l.b16 %v2594
    %v2755 = vunpack.c.l.b16 %v2595
    %v2756 = vunpack.c.l.b16 %v2596
    %v2757 = vunpack.c.l.b16 %v2597
    %v2758 = vunpack.c.l.b16 %v2598
    %v2759 = vunpack.c.l.b16 %v2599
    %v2760 = vunpack.c.l.b16 %v2600
    %v2761 = vunpack.c.l.b16 %v2601
    %v2762 = vunpack.c.l.b16 %v2602
    %v2763 = vpack.c.b16 %v2748, %v2747
    %v2764 = vpack.c.b16 %v2750, %v2749
    %v2765 = vpack.c.b16 %v2752, %v2751
    %v2766 = vpack.c.b16 %v2754, %v2753
    %v2767 = vpack.c.b16 %v2756, %v2755
    %v2768 = vpack.c.b16 %v2758, %v2757
    %v2769 = vpack.c.b16 %v2760, %v2759
    %v2770 = vpack.c.b16 %v2762, %v2761
    %2779 = vmatprep.subr.bf16.mxu0 0
    %2780 = vmatpush1.bf16.msra.mxu0 %v2763
    %2781 = vmatprep.subr.bf16.mxu0 0
    %2782 = vmatpush1.bf16.msra.mxu0 %v2764
    %2783 = vmatprep.subr.bf16.mxu0 0
    %2784 = vmatpush1.bf16.msra.mxu0 %v2765
    %2785 = vmatprep.subr.bf16.mxu0 0
    %2786 = vmatpush1.bf16.msra.mxu0 %v2766
    %2787 = vmatprep.subr.bf16.mxu0 0
    %2788 = vmatpush1.bf16.msra.mxu0 %v2767
    %2789 = vmatprep.subr.bf16.mxu0 0
    %2790 = vmatpush1.bf16.msra.mxu0 %v2768
    %2791 = vmatprep.subr.bf16.mxu0 0
    %2792 = vmatpush1.bf16.msra.mxu0 %v2769
    %2793 = vmatprep.subr.bf16.mxu0 0
    %2794 = vmatpush1.bf16.msra.mxu0 %v2770
    %2795 = vmatprep.subr.bf16.mxu0 0
    %2796 = vmatpush1.bf16.msra.mxu0 0
    %2797 = vmatprep.subr.bf16.mxu0 0
    %2798 = vmatpush1.bf16.msra.mxu0 0
    %2799 = vmatprep.subr.bf16.mxu0 0
    %2800 = vmatpush1.bf16.msra.mxu0 0
    %2801 = vmatprep.subr.bf16.mxu0 0
    %2802 = vmatpush1.bf16.msra.mxu0 0
    %2803 = vmatprep.subr.bf16.mxu0 0
    %2804 = vmatpush1.bf16.msra.mxu0 0
    %2805 = vmatprep.subr.bf16.mxu0 0
    %2806 = vmatpush1.bf16.msra.mxu0 0
    %2807 = vmatprep.subr.bf16.mxu0 0
    %2808 = vmatpush1.bf16.msra.mxu0 0
    %2809 = vmatprep.subr.bf16.mxu0 0
    %2810 = vmatpush1.bf16.msra.mxu0 0
    %2811 = vmatprep.mubr.bf16.mxu0 0
    %2812 = vmatmul.mubr.bf16.gmra.mrb[0].mxu0 %v2727
    %v2813 = vpop.f32.mrb[0].mxu0
    %v2814 = vadd.f32 %v2606, %v2813
    %v2815 = vpop.f32.mrb[0].mxu0
    %v2816 = vpop.f32.mrb[0].mxu0
    %v2817 = vadd.f32 %v2606, %v2816
    %v2818 = vpop.f32.mrb[0].mxu0
    %2819 = vmatprep.mubr.bf16.mxu0 0
    %2820 = vmatmul.mubr.bf16.gmra.mrb[0].mxu0 %v2728
    %v2821 = vpop.f32.mrb[0].mxu0
    %v2822 = vadd.f32 %v2606, %v2821
    %v2823 = vpop.f32.mrb[0].mxu0
    %v2824 = vpop.f32.mrb[0].mxu0
    %v2825 = vadd.f32 %v2606, %v2824
    %v2826 = vpop.f32.mrb[0].mxu0
    %2827 = vdwg.mxu0
    %v2828 = vmul.f32 %v2814, 0.5
    %v2829 = vmul.f32 %v2817, 0.5
    %v2830 = vmul.f32 %v2822, 0.5
    %v2831 = vmul.f32 %v2825, 0.5
    %v2832 = vmul.f32 %v2814, 0.70710677
    %v2833 = vmul.f32 %v2817, 0.70710677
    %v2834 = vmul.f32 %v2822, 0.70710677
    %v2835 = vmul.f32 %v2825, 0.70710677
    %v2836 = verf.f32.pop %v2832
    %v2837 = verf.f32.pop %v2833
    %v2838 = verf.f32.pop %v2834
    %v2839 = verf.f32.pop %v2835
    %v2840 = vadd.f32 %v2836, 1.0
    %v2841 = vadd.f32 %v2837, 1.0
    %v2842 = vadd.f32 %v2838, 1.0
    %v2843 = vadd.f32 %v2839, 1.0
    %v2844 = vmul.f32 %v2828, %v2840
    %v2845 = vmul.f32 %v2829, %v2841
    %v2846 = vmul.f32 %v2830, %v2842
    %v2847 = vmul.f32 %v2831, %v2843
    %v2880 = vrot.slane %v2524, 7
    %v2881 = vsel %vm718, %v2880, %v2523
    %v2882 = vrot.slane %v2525, 6
    %v2883 = vsel %vm720, %v2882, %v2881
    %v2884 = vrot.slane %v2526, 5
    %v2885 = vsel %vm722, %v2884, %v2883
    %v2886 = vrot.slane %v2527, 4
    %v2887 = vsel %vm724, %v2886, %v2885
    %v2888 = vrot.slane %v2528, 3
    %v2889 = vsel %vm726, %v2888, %v2887
    %v2890 = vrot.slane %v2529, 2
    %v2891 = vsel %vm728, %v2890, %v2889
    %v2892 = vrot.slane %v2530, 1
    %v2893 = vsel %vm730, %v2892, %v2891
    %v2894 = vrot.slane %v2532, 7
    %v2895 = vsel %vm718, %v2894, %v2531
    %v2896 = vrot.slane %v2533, 6
    %v2897 = vsel %vm720, %v2896, %v2895
    %v2898 = vrot.slane %v2534, 5
    %v2899 = vsel %vm722, %v2898, %v2897
    %v2900 = vrot.slane %v2535, 4
    %v2901 = vsel %vm724, %v2900, %v2899
    %v2902 = vrot.slane %v2536, 3
    %v2903 = vsel %vm726, %v2902, %v2901
    %v2904 = vrot.slane %v2537, 2
    %v2905 = vsel %vm728, %v2904, %v2903
    %v2906 = vrot.slane %v2538, 1
    %v2907 = vsel %vm730, %v2906, %v2905
    %v2908 = vrot.slane %v2540, 7
    %v2909 = vsel %vm718, %v2908, %v2539
    %v2910 = vrot.slane %v2541, 6
    %v2911 = vsel %vm720, %v2910, %v2909
    %v2912 = vrot.slane %v2542, 5
    %v2913 = vsel %vm722, %v2912, %v2911
    %v2914 = vrot.slane %v2543, 4
    %v2915 = vsel %vm724, %v2914, %v2913
    %v2916 = vrot.slane %v2544, 3
    %v2917 = vsel %vm726, %v2916, %v2915
    %v2918 = vrot.slane %v2545, 2
    %v2919 = vsel %vm728, %v2918, %v2917
    %v2920 = vrot.slane %v2546, 1
    %v2921 = vsel %vm730, %v2920, %v2919
    %v2922 = vrot.slane %v2548, 7
    %v2923 = vsel %vm718, %v2922, %v2547
    %v2924 = vrot.slane %v2549, 6
    %v2925 = vsel %vm720, %v2924, %v2923
    %v2926 = vrot.slane %v2550, 5
    %v2927 = vsel %vm722, %v2926, %v2925
    %v2928 = vrot.slane %v2551, 4
    %v2929 = vsel %vm724, %v2928, %v2927
    %v2930 = vrot.slane %v2552, 3
    %v2931 = vsel %vm726, %v2930, %v2929
    %v2932 = vrot.slane %v2553, 2
    %v2933 = vsel %vm728, %v2932, %v2931
    %v2934 = vrot.slane %v2554, 1
    %v2935 = vsel %vm730, %v2934, %v2933
    %v2940 = vadd.f32 %v2844, %v2893
    %v2941 = vadd.f32 %v2845, %v2907
    %v2942 = vadd.f32 %v2846, %v2921
    %v2943 = vadd.f32 %v2847, %v2935
    %v2944 = vpack.c.bf16 %v2941, %v2940
    %v2945 = vpack.c.bf16 %v2943, %v2942
    %v2946 = vld [vmem:[#allocation10] sm:$0xf]
    %v2947 = vld [vmem:[#allocation10 + $0x4] sm:$0xf]
    %v2948 = vld [vmem:[#allocation10 + $0x8] sm:$0xf]
    %v2949 = vld [vmem:[#allocation10 + $0xc] sm:$0xf]
    %v2950 = vld [vmem:[#allocation10 + $0x10] sm:$0xf]
    %v2951 = vld [vmem:[#allocation10 + $0x14] sm:$0xf]
    %v2952 = vld [vmem:[#allocation10 + $0x18] sm:$0xf]
    %v2953 = vld [vmem:[#allocation10 + $0x1c] sm:$0xf]
    %v2954 = vld [vmem:[#allocation10 + $0x20] sm:$0xf]
    %v2955 = vld [vmem:[#allocation10 + $0x24] sm:$0xf]
    %v2956 = vld [vmem:[#allocation10 + $0x28] sm:$0xf]
    %v2957 = vld [vmem:[#allocation10 + $0x2c] sm:$0xf]
    %v2958 = vld [vmem:[#allocation10 + $0x30] sm:$0xf]
    %v2959 = vld [vmem:[#allocation10 + $0x34] sm:$0xf]
    %v2960 = vld [vmem:[#allocation10 + $0x38] sm:$0xf]
    %v2961 = vld [vmem:[#allocation10 + $0x3c] sm:$0xf]
    %v2962 = vlaneseq
    %v2963 = vshrl.u32 %v2962, 7
    %v2964 = vsub.s32 0, %v2963
    %v2965 = vrot.slane %v144, %v2964
    %v2982 = vunpack.c.l.b16 %v2946
    %v2983 = vunpack.c.l.b16 %v2947
    %v2984 = vunpack.c.l.b16 %v2948
    %v2985 = vunpack.c.l.b16 %v2949
    %v2986 = vunpack.c.l.b16 %v2950
    %v2987 = vunpack.c.l.b16 %v2951
    %v2988 = vunpack.c.l.b16 %v2952
    %v2989 = vunpack.c.l.b16 %v2953
    %v2990 = vunpack.c.l.b16 %v2954
    %v2991 = vunpack.c.l.b16 %v2955
    %v2992 = vunpack.c.l.b16 %v2956
    %v2993 = vunpack.c.l.b16 %v2957
    %v2994 = vunpack.c.l.b16 %v2958
    %v2995 = vunpack.c.l.b16 %v2959
    %v2996 = vunpack.c.l.b16 %v2960
    %v2997 = vunpack.c.l.b16 %v2961
    %v2998 = vpack.c.b16 %v2983, %v2982
    %v2999 = vpack.c.b16 %v2985, %v2984
    %v3000 = vpack.c.b16 %v2987, %v2986
    %v3001 = vpack.c.b16 %v2989, %v2988
    %v3002 = vpack.c.b16 %v2991, %v2990
    %v3003 = vpack.c.b16 %v2993, %v2992
    %v3004 = vpack.c.b16 %v2995, %v2994
    %v3005 = vpack.c.b16 %v2997, %v2996
    %3014 = vmatprep.subr.bf16.mxu0 0
    %3015 = vmatpush1.bf16.msra.mxu0 %v2998
    %3016 = vmatprep.subr.bf16.mxu0 0
    %3017 = vmatpush1.bf16.msra.mxu0 %v2999
    %3018 = vmatprep.subr.bf16.mxu0 0
    %3019 = vmatpush1.bf16.msra.mxu0 %v3000
    %3020 = vmatprep.subr.bf16.mxu0 0
    %3021 = vmatpush1.bf16.msra.mxu0 %v3001
    %3022 = vmatprep.subr.bf16.mxu0 0
    %3023 = vmatpush1.bf16.msra.mxu0 %v3002
    %3024 = vmatprep.subr.bf16.mxu0 0
    %3025 = vmatpush1.bf16.msra.mxu0 %v3003
    %3026 = vmatprep.subr.bf16.mxu0 0
    %3027 = vmatpush1.bf16.msra.mxu0 %v3004
    %3028 = vmatprep.subr.bf16.mxu0 0
    %3029 = vmatpush1.bf16.msra.mxu0 %v3005
    %3030 = vmatprep.subr.bf16.mxu0 0
    %3031 = vmatpush1.bf16.msra.mxu0 0
    %3032 = vmatprep.subr.bf16.mxu0 0
    %3033 = vmatpush1.bf16.msra.mxu0 0
    %3034 = vmatprep.subr.bf16.mxu0 0
    %3035 = vmatpush1.bf16.msra.mxu0 0
    %3036 = vmatprep.subr.bf16.mxu0 0
    %3037 = vmatpush1.bf16.msra.mxu0 0
    %3038 = vmatprep.subr.bf16.mxu0 0
    %3039 = vmatpush1.bf16.msra.mxu0 0
    %3040 = vmatprep.subr.bf16.mxu0 0
    %3041 = vmatpush1.bf16.msra.mxu0 0
    %3042 = vmatprep.subr.bf16.mxu0 0
    %3043 = vmatpush1.bf16.msra.mxu0 0
    %3044 = vmatprep.subr.bf16.mxu0 0
    %3045 = vmatpush1.bf16.msra.mxu0 0
    %3046 = vmatprep.mubr.bf16.mxu0 0
    %3047 = vmatmul.mubr.bf16.gmra.mrb[0].mxu0 %v2944
    %v3048 = vpop.f32.mrb[0].mxu0
    %v3049 = vadd.f32 %v2965, %v3048
    %v3050 = vpop.f32.mrb[0].mxu0
    %v3051 = vpop.f32.mrb[0].mxu0
    %v3052 = vadd.f32 %v2965, %v3051
    %v3053 = vpop.f32.mrb[0].mxu0
    %3054 = vmatprep.mubr.bf16.mxu0 0
    %3055 = vmatmul.mubr.bf16.gmra.mrb[0].mxu0 %v2945
    %v3056 = vpop.f32.mrb[0].mxu0
    %v3057 = vadd.f32 %v2965, %v3056
    %v3058 = vpop.f32.mrb[0].mxu0
    %v3059 = vpop.f32.mrb[0].mxu0
    %v3060 = vadd.f32 %v2965, %v3059
    %v3061 = vpop.f32.mrb[0].mxu0
    %3062 = vdwg.mxu0
    %v3063 = vmul.f32 %v3049, 0.5
    %v3064 = vmul.f32 %v3052, 0.5
    %v3065 = vmul.f32 %v3057, 0.5
    %v3066 = vmul.f32 %v3060, 0.5
    %v3067 = vmul.f32 %v3049, 0.70710677
    %v3068 = vmul.f32 %v3052, 0.70710677
    %v3069 = vmul.f32 %v3057, 0.70710677
    %v3070 = vmul.f32 %v3060, 0.70710677
    %v3071 = verf.f32.pop %v3067
    %v3072 = verf.f32.pop %v3068
    %v3073 = verf.f32.pop %v3069
    %v3074 = verf.f32.pop %v3070
    %v3075 = vadd.f32 %v3071, 1.0
    %v3076 = vadd.f32 %v3072, 1.0
    %v3077 = vadd.f32 %v3073, 1.0
    %v3078 = vadd.f32 %v3074, 1.0
    %v3079 = vmul.f32 %v3063, %v3075
    %v3080 = vmul.f32 %v3064, %v3076
    %v3081 = vmul.f32 %v3065, %v3077
    %v3082 = vmul.f32 %v3066, %v3078
    %v3083 = vpack.c.bf16 %v3080, %v3079
    %v3084 = vpack.c.bf16 %v3082, %v3081
    %v3085 = vld [vmem:[%s6] sm:$0xf]
    %v3086 = vld [vmem:[%s6 + $0x4] sm:$0xf]
    %v3087 = vld [vmem:[%s6 + $0x8] sm:$0xf]
    %v3088 = vld [vmem:[%s6 + $0xc] sm:$0xf]
    %v3089 = vld [vmem:[%s6 + $0x10] sm:$0xf]
    %v3090 = vld [vmem:[%s6 + $0x14] sm:$0xf]
    %v3091 = vld [vmem:[%s6 + $0x18] sm:$0xf]
    %v3092 = vld [vmem:[%s6 + $0x1c] sm:$0xf]
    %v3093 = vlaneseq
    %v3094 = vshrl.u32 %v3093, 7
    %v3095 = vsub.s32 0, %v3094
    %v3096 = vrot.slane %v145, %v3095
    %v3105 = vunpack.c.l.b16 %v3085
    %v3106 = vunpack.c.l.b16 %v3086
    %v3107 = vunpack.c.l.b16 %v3087
    %v3108 = vunpack.c.l.b16 %v3088
    %v3109 = vunpack.c.l.b16 %v3089
    %v3110 = vunpack.c.l.b16 %v3090
    %v3111 = vunpack.c.l.b16 %v3091
    %v3112 = vunpack.c.l.b16 %v3092
    %v3113 = vpack.c.b16 %v3106, %v3105
    %v3114 = vpack.c.b16 %v3108, %v3107
    %v3115 = vpack.c.b16 %v3110, %v3109
    %v3116 = vpack.c.b16 %v3112, %v3111
    %v3122 = vsel %vm459, %v3083, 0
    %v3125 = vsel %vm459, %v3084, 0
    %3127 = vmatprep.subr.bf16.mxu0 0
    %3128 = vmatpush1.bf16.msra.mxu0 %v3113
    %3129 = vmatprep.subr.bf16.mxu0 0
    %3130 = vmatpush1.bf16.msra.mxu0 %v3114
    %3131 = vmatprep.subr.bf16.mxu0 0
    %3132 = vmatpush1.bf16.msra.mxu0 %v3115
    %3133 = vmatprep.subr.bf16.mxu0 0
    %3134 = vmatpush1.bf16.msra.mxu0 %v3116
    %3135 = vmatprep.subr.bf16.mxu0 0
    %3136 = vmatpush1.bf16.msra.mxu0 0
    %3137 = vmatprep.subr.bf16.mxu0 0
    %3138 = vmatpush1.bf16.msra.mxu0 0
    %3139 = vmatprep.subr.bf16.mxu0 0
    %3140 = vmatpush1.bf16.msra.mxu0 0
    %3141 = vmatprep.subr.bf16.mxu0 0
    %3142 = vmatpush1.bf16.msra.mxu0 0
    %3143 = vmatprep.subr.bf16.mxu0 0
    %3144 = vmatpush1.bf16.msra.mxu0 0
    %3145 = vmatprep.subr.bf16.mxu0 0
    %3146 = vmatpush1.bf16.msra.mxu0 0
    %3147 = vmatprep.subr.bf16.mxu0 0
    %3148 = vmatpush1.bf16.msra.mxu0 0
    %3149 = vmatprep.subr.bf16.mxu0 0
    %3150 = vmatpush1.bf16.msra.mxu0 0
    %3151 = vmatprep.subr.bf16.mxu0 0
    %3152 = vmatpush1.bf16.msra.mxu0 0
    %3153 = vmatprep.subr.bf16.mxu0 0
    %3154 = vmatpush1.bf16.msra.mxu0 0
    %3155 = vmatprep.subr.bf16.mxu0 0
    %3156 = vmatpush1.bf16.msra.mxu0 0
    %3157 = vmatprep.subr.bf16.mxu0 0
    %3158 = vmatpush1.bf16.msra.mxu0 0
    %3159 = vmatprep.mubr.bf16.mxu0 0
    %3160 = vmatmul.mubr.bf16.gmra.mrb[0].mxu0 %v3122
    %v3161 = vpop.f32.mrb[0].mxu0
    %v3162 = vadd.f32 %v3096, %v3161
    %v3163 = vpop.f32.mrb[0].mxu0
    %v3164 = vpop.f32.mrb[0].mxu0
    %v3165 = vadd.f32 %v3096, %v3164
    %v3166 = vpop.f32.mrb[0].mxu0
    %3167 = vmatprep.mubr.bf16.mxu0 0
    %3168 = vmatmul.mubr.bf16.gmra.mrb[0].mxu0 %v3125
    %v3169 = vpop.f32.mrb[0].mxu0
    %v3170 = vadd.f32 %v3096, %v3169
    %v3171 = vpop.f32.mrb[0].mxu0
    %v3172 = vpop.f32.mrb[0].mxu0
    %v3173 = vadd.f32 %v3096, %v3172
    %v3174 = vpop.f32.mrb[0].mxu0
    %3175 = vdwg.mxu0
    %3176 = vst [vmem:[%s7] sm:$0xff] %v3162
    %3177 = vst [vmem:[%s7 + $0x8] sm:$0xff] %v3165
    %3178 = vst [vmem:[%s7 + $0x10] sm:$0xff] %v3170
    %3179 = vst [vmem:[%s7 + $0x18] sm:$0xff] %v3173
    // Predicated region
    $region54: #{head.1} parent=1 // pred_check
      _
    $region55: #{head.1} parent=1 // pred_check_branch
      %3181 = sbr.rel (0) target = $region57
    $region56: #{head.1} parent=1 // pred_region
      _
    $region57: #{head.1} parent=1 // pred_fallthru
      _
    // Predicated region
    $region58: #{head.1} parent=1 // pred_check
      _
    $region59: #{head.1} parent=1 // pred_check_branch
      %3183 = sbr.rel (0) target = $region61
    $region60: #{head.1} parent=1 // pred_region
      _
    $region61: #{head.1} parent=1 // pred_fallthru
      _
    %3184 = vsyncpa [#allocation3], 1
    %3185 = vsyncpa [#allocation5], 1
    %3186 = vsyncpa [#allocation8], 1
    %3187 = vsyncpa [#allocation11], 1

</llo_original>
